<compile_context>
chip_gen: v5e
topology: v5e:2x2
jax: 0.10.0
libtpu: 0.0.40
codegen_flags: <defaults>
</compile_context>

<pallas_src>
import numpy as np
import jax
import jax.numpy as jnp
from jax import lax
from jax.experimental import pallas as pl
from jax.experimental.pallas import tpu as pltpu

EPS = 1e-5                      # torch.nn.BatchNorm2d default eps
VMEM_LIMIT = 32 * 1024 * 1024   # explicit scoped-VMEM cap (fits v5e/v6e/v7x)


def _round_up(x, m):
    return ((x + m - 1) // m) * m


def _pick_tile(m, tm_max, align):
    # Tile for the grid axis: multiple of `align`, capped at tm_max, and split into
    # >= 2 grid steps whenever m allows it (v7x has 2 TensorCores; the axis is
    # marked "parallel").
    m_al = _round_up(m, align)
    if m_al >= 2 * align:
        tm = min(tm_max, _round_up((m_al + 1) // 2, align))
    else:
        tm = m_al
    return tm, _round_up(m, tm)


# ----------------------------- Pallas kernels ------------------------------

def conv_bn_relu_pool_kernel(pq_ref, wt_ref, scale_ref, bias_ref, out_ref):
    # pq_ref:    (4, KKC, TM) bf16  im2col patches, one slab per 2x2 pool position
    # wt_ref:    (Cout, KKC)  bf16  conv weight, transposed (rows = out channels)
    # scale_ref: (Cout, 1)    f32   folded BN scale
    # bias_ref:  (Cout, 1)    f32   folded conv-bias + BN shift
    # out_ref:   (Cout, TM)   bf16  pooled output (lane dim = pooled pixels -> dense)
    w = wt_ref[...].astype(jnp.float32)       # bf16 in memory, f32 operands for dot
    s = scale_ref[...]
    b = bias_ref[...]
    acc = None
    for q in range(4):  # static unroll: 4 quadrant conv matmuls + elementwise max
        x = pq_ref[q].astype(jnp.float32)
        z = jnp.dot(w, x, preferred_element_type=jnp.float32)   # MXU, f32 acc
        z = jnp.maximum(z * s + b, 0.0)                         # BN + ReLU (VPU, f32)
        acc = z if acc is None else jnp.maximum(acc, z)         # 2x2 max-pool (VPU)
    out_ref[...] = acc.astype(out_ref.dtype)


def fc_kernel(x_ref, w_ref, b_ref, o_ref):
    # x_ref: (TM, Din) bf16, w_ref: (Din, Dout_pad) bf16, b_ref: (1, Dout_pad) f32
    x = x_ref[...].astype(jnp.float32)
    w = w_ref[...].astype(jnp.float32)
    o_ref[...] = jnp.dot(x, w, preferred_element_type=jnp.float32) + b_ref[...]


# ------------------------------ JAX glue ----------------------------------

def _im2col_quadrants_t(x_nhwc, K, pad, kkc):
    # (N,H,W,C) -> (4, kkc, N*(H//2)*(W//2)) built directly in the kernel layout:
    #   quadrant q = 2*dh+dw holds conv-output pixel (2*ph+dh, 2*pw+dw);
    #   rows ordered (kh, kw, c); columns ordered (n, ph, pw).  Kept in bf16.
    N, H, W, C = x_nhwc.shape
    Ph, Pw = H // 2, W // 2
    M = N * Ph * Pw
    xp = jnp.pad(x_nhwc, ((0, 0), (pad, pad), (pad, pad), (0, 0)))
    cols = [xp[:, kh:kh + H, kw:kw + W, :] for kh in range(K) for kw in range(K)]
    patches = jnp.stack(cols, axis=0)                       # (K*K, N, H, W, C)
    quads = []
    for dh in range(2):
        for dw in range(2):
            q = patches[:, :, dh::2, dw::2, :]              # (K*K, N, Ph, Pw, C)
            q = jnp.transpose(q, (0, 4, 1, 2, 3)).reshape(K * K * C, M)
            quads.append(q)
    out = jnp.stack(quads, axis=0)                          # (4, K*K*C, M)
    if kkc > K * K * C:                                     # pad contraction (25 -> 32)
        out = jnp.pad(out, ((0, 0), (0, kkc - K * K * C), (0, 0)))
    return out


def _flatten_conv_weight(w, kkc_pad=None):
    # torch OIHW (Cout, Cin, K, K) -> (K*K*Cin, Cout), row order (kh, kw, cin)
    Cout, Cin, K, _ = w.shape
    wf = jnp.transpose(w, (2, 3, 1, 0)).reshape(K * K * Cin, Cout)
    if kkc_pad is not None and kkc_pad > K * K * Cin:
        wf = jnp.pad(wf, ((0, kkc_pad - K * K * Cin), (0, 0)))
    return wf


def _fold_bn(conv_bias, gamma, beta, rmean, rvar):
    scale = gamma / jnp.sqrt(rvar + EPS)
    bias = (conv_bias - rmean) * scale + beta
    return scale, bias


def conv_bn_relu_pool(x_nhwc, w_flat, scale, bias, K=5, pad=2, tm_max=2048):
    # Fused conv(5x5, pad 2, stride 1) + folded BN + ReLU + 2x2/2 max-pool.
    # Returns (Cout, N, H//2, W//2) in bf16.
    N, H, W, Cin = x_nhwc.shape
    KKC, Cout = w_flat.shape
    Ph, Pw = H // 2, W // 2
    M = N * Ph * Pw
    TM, M_pad = _pick_tile(M, tm_max, 128)

    quads = _im2col_quadrants_t(x_nhwc.astype(jnp.bfloat16), K, pad, KKC)
    quads = jnp.pad(quads, ((0, 0), (0, 0), (0, M_pad - M)))      # (4, KKC, M_pad) bf16
    w_t = w_flat.T.astype(jnp.bfloat16)                           # (Cout, KKC)

    out = pl.pallas_call(
        conv_bn_relu_pool_kernel,
        out_shape=jax.ShapeDtypeStruct((Cout, M_pad), jnp.bfloat16),
        grid_spec=pltpu.PrefetchScalarGridSpec(
            num_scalar_prefetch=0,
            grid=(M_pad // TM,),
            in_specs=[
                pl.BlockSpec((4, KKC, TM), lambda m: (0, 0, m)),
                pl.BlockSpec((Cout, KKC), lambda m: (0, 0)),
                pl.BlockSpec((Cout, 1), lambda m: (0, 0)),
                pl.BlockSpec((Cout, 1), lambda m: (0, 0)),
            ],
            out_specs=pl.BlockSpec((Cout, TM), lambda m: (0, m)),
        ),
        compiler_params=pltpu.CompilerParams(
            dimension_semantics=("parallel",),
            vmem_limit_bytes=VMEM_LIMIT),
    )(quads, w_t, scale.reshape(Cout, 1), bias.reshape(Cout, 1))

    # Drop padded M columns (they hold relu(bias) garbage); columns are (n, ph, pw).
    return out[:, :M].reshape(Cout, N, Ph, Pw)


def fc(x_flat, w_torch, b, tm_max=256):
    # x_flat (N, Din) bf16; w_torch (Dout, Din) f32; returns (N, Dout) f32.
    # Output lanes padded Dout 10 -> 128 for lane-dense unmasked stores.
    N, Din = x_flat.shape
    Dout = w_torch.shape[0]
    Dout_pad = _round_up(Dout, 128)
    TM, N_pad = _pick_tile(N, tm_max, 8)
    xp = jnp.pad(x_flat.astype(jnp.bfloat16), ((0, N_pad - N), (0, 0)))
    wp = jnp.pad(w_torch.T.astype(jnp.bfloat16), ((0, 0), (0, Dout_pad - Dout)))
    bp = jnp.pad(b, (0, Dout_pad - Dout)).reshape(1, Dout_pad)

    out = pl.pallas_call(
        fc_kernel,
        out_shape=jax.ShapeDtypeStruct((N_pad, Dout_pad), jnp.float32),
        grid_spec=pltpu.PrefetchScalarGridSpec(
            num_scalar_prefetch=0,
            grid=(N_pad // TM,),
            in_specs=[
                pl.BlockSpec((TM, Din), lambda i: (i, 0)),
                pl.BlockSpec((Din, Dout_pad), lambda i: (0, 0)),
                pl.BlockSpec((1, Dout_pad), lambda i: (0, 0)),
            ],
            out_specs=pl.BlockSpec((TM, Dout_pad), lambda i: (i, 0)),
        ),
        compiler_params=pltpu.CompilerParams(
            dimension_semantics=("parallel",),
            vmem_limit_bytes=VMEM_LIMIT),
    )(xp, wp, bp)
    return out[:N, :Dout]


@jax.jit
def convnet_forward(x_nchw, p):
    N = x_nchw.shape[0]
    x = jnp.transpose(x_nchw, (0, 2, 3, 1)).astype(jnp.bfloat16)     # NHWC bf16

    s1, b1 = _fold_bn(p["b1"], p["g1"], p["beta1"], p["rm1"], p["rv1"])
    w1 = _flatten_conv_weight(p["w1"], kkc_pad=32)                   # (32, 16)
    y1 = conv_bn_relu_pool(x, w1, s1, b1, tm_max=2048)               # (16, N, 14, 14) bf16

    s2, b2 = _fold_bn(p["b2"], p["g2"], p["beta2"], p["rm2"], p["rv2"])
    w2 = _flatten_conv_weight(p["w2"])                               # (400, 32)
    y1_nhwc = jnp.transpose(y1, (1, 2, 3, 0))                        # (N, 14, 14, 16) bf16
    y2 = conv_bn_relu_pool(y1_nhwc, w2, s2, b2, tm_max=2048)         # (32, N, 7, 7) bf16

    # match torch `out.reshape(N, -1)` on an NCHW tensor: (c, ph, pw) flatten order
    feat = jnp.transpose(y2, (1, 0, 2, 3)).reshape(N, -1)            # (N, 1568) bf16
    return fc(feat, p["fcw"], p["fcb"])                              # (N, 10) f32


# -------------------------- reference & params -----------------------------

def convnet_reference(x_nchw, p):
    def conv(x, w, b):
        y = lax.conv_general_dilated(x, w, (1, 1), ((2, 2), (2, 2)),
                                     dimension_numbers=("NCHW", "OIHW", "NCHW"))
        return y + b[None, :, None, None]

    def bn(x, g, bt, m, v):
        return ((x - m[None, :, None, None]) / jnp.sqrt(v[None, :, None, None] + EPS)
                * g[None, :, None, None] + bt[None, :, None, None])

    def pool(x):
        return lax.reduce_window(x, -jnp.inf, lax.max, (1, 1, 2, 2), (1, 1, 2, 2), "VALID")

    y = pool(jnp.maximum(bn(conv(x_nchw, p["w1"], p["b1"]),
                            p["g1"], p["beta1"], p["rm1"], p["rv1"]), 0.0))
    y = pool(jnp.maximum(bn(conv(y, p["w2"], p["b2"]),
                            p["g2"], p["beta2"], p["rm2"], p["rv2"]), 0.0))
    y = y.reshape(y.shape[0], -1)
    return y @ p["fcw"].T + p["fcb"]


def init_params(key):
    ks = jax.random.split(key, 14)
    f32 = jnp.float32
    return {
        "w1": 0.10 * jax.random.normal(ks[0], (16, 1, 5, 5), f32),       # torch OIHW
        "b1": 0.05 * jax.random.normal(ks[1], (16,), f32),
        "g1": 1.0 + 0.10 * jax.random.normal(ks[2], (16,), f32),
        "beta1": 0.05 * jax.random.normal(ks[3], (16,), f32),
        "rm1": 0.05 * jax.random.normal(ks[4], (16,), f32),
        "rv1": 1.0 + 0.50 * jax.random.uniform(ks[5], (16,), f32),
        "w2": 0.05 * jax.random.normal(ks[6], (32, 16, 5, 5), f32),
        "b2": 0.05 * jax.random.normal(ks[7], (32,), f32),
        "g2": 1.0 + 0.10 * jax.random.normal(ks[8], (32,), f32),
        "beta2": 0.05 * jax.random.normal(ks[9], (32,), f32),
        "rm2": 0.05 * jax.random.normal(ks[10], (32,), f32),
        "rv2": 1.0 + 0.50 * jax.random.uniform(ks[11], (32,), f32),
        "fcw": 0.05 * jax.random.normal(ks[12], (10, 7 * 7 * 32), f32),  # torch (out, in)
        "fcb": 0.05 * jax.random.normal(ks[13], (10,), f32),
    }


if __name__ == "__main__":
    key = jax.random.PRNGKey(0)
    kx, kp = jax.random.split(key)
    # 28x28 single-channel input is implied by the 7*7*32 FC layer (two 2x maxpools).
    x = jax.random.normal(kx, (2, 1, 28, 28), jnp.float32)
    params = init_params(kp)

    out = jax.block_until_ready(convnet_forward(x, params))
    assert out.shape == (2, 10) and out.dtype == jnp.float32

    ref = convnet_reference(x, params)
    # bf16 activations / matmul operands (f32 accumulation) -> loosened tolerance.
    np.testing.assert_allclose(np.asarray(out), np.asarray(ref), rtol=2e-2, atol=4e-2)
    print("KERNEL_OK")
</pallas_src>

<mosaic_0001>
module attributes {stable_mosaic.version = 11 : i64} {
  func.func @conv_bn_relu_pool_kernel(%arg0: i32, %arg1: memref<4x32x256xbf16, #tpu.memory_space<vmem>>, %arg2: memref<16x32xbf16, #tpu.memory_space<vmem>>, %arg3: memref<16x1xf32, #tpu.memory_space<vmem>>, %arg4: memref<16x1xf32, #tpu.memory_space<vmem>>, %arg5: memref<16x256xbf16, #tpu.memory_space<vmem>>) attributes {dimension_semantics = [#tpu.dimension_semantics<parallel>], iteration_bounds = array<i64: 2>, scalar_prefetch = 0 : i64, scratch_operands = 0 : i64, tpu.core_type = #tpu.core_type<tc>, window_params = [{transform_indices = @transform_0, window_bounds = array<i64: 4, 32, 256>}, {pipeline_mode = #tpu.pipeline_mode<synchronous>, transform_indices = @transform_1, window_bounds = array<i64: 16, 32>}, {pipeline_mode = #tpu.pipeline_mode<synchronous>, transform_indices = @transform_2, window_bounds = array<i64: 16, 1>}, {pipeline_mode = #tpu.pipeline_mode<synchronous>, transform_indices = @transform_3, window_bounds = array<i64: 16, 1>}, {transform_indices = @transform_4, window_bounds = array<i64: 16, 256>}]} {
    %c0 = arith.constant 0 : index
    %c0_0 = arith.constant 0 : index
    %0 = vector.load %arg2[%c0, %c0_0] : memref<16x32xbf16, #tpu.memory_space<vmem>>, vector<16x32xbf16>
    %1 = arith.extf %0 : vector<16x32xbf16> to vector<16x32xf32>
    %c0_1 = arith.constant 0 : index
    %c0_2 = arith.constant 0 : index
    %2 = vector.load %arg3[%c0_1, %c0_2] : memref<16x1xf32, #tpu.memory_space<vmem>>, vector<16x1xf32>
    %c0_3 = arith.constant 0 : index
    %c0_4 = arith.constant 0 : index
    %3 = vector.load %arg4[%c0_3, %c0_4] : memref<16x1xf32, #tpu.memory_space<vmem>>, vector<16x1xf32>
    %c0_5 = arith.constant 0 : index
    %c0_6 = arith.constant 0 : index
    %c0_7 = arith.constant 0 : index
    %4 = vector.load %arg1[%c0_5, %c0_6, %c0_7] : memref<4x32x256xbf16, #tpu.memory_space<vmem>>, vector<1x32x256xbf16>
    %5 = vector.shape_cast %4 : vector<1x32x256xbf16> to vector<32x256xbf16>
    %6 = arith.extf %5 : vector<32x256xbf16> to vector<32x256xf32>
    %cst = arith.constant dense<0.000000e+00> : vector<16x256xf32>
    %7 = tpu.matmul %1, %6, %cst {dimension_numbers = #tpu.dot_dimension_numbers<[1], [0], [0], [1], [0, 0, 1, 1], [], []>} : vector<16x32xf32>, vector<32x256xf32>, vector<16x256xf32> -> vector<16x256xf32>
    %8 = vector.broadcast %2 : vector<16x1xf32> to vector<16x256xf32>
    %9 = arith.mulf %7, %8 : vector<16x256xf32>
    %10 = vector.broadcast %3 : vector<16x1xf32> to vector<16x256xf32>
    %11 = arith.addf %9, %10 : vector<16x256xf32>
    %cst_8 = arith.constant 0.000000e+00 : f32
    %12 = vector.broadcast %cst_8 : f32 to vector<16x256xf32>
    %13 = arith.maximumf %11, %12 : vector<16x256xf32>
    %c1 = arith.constant 1 : index
    %c0_9 = arith.constant 0 : index
    %c0_10 = arith.constant 0 : index
    %14 = vector.load %arg1[%c1, %c0_9, %c0_10] : memref<4x32x256xbf16, #tpu.memory_space<vmem>>, vector<1x32x256xbf16>
    %15 = vector.shape_cast %14 : vector<1x32x256xbf16> to vector<32x256xbf16>
    %16 = arith.extf %15 : vector<32x256xbf16> to vector<32x256xf32>
    %cst_11 = arith.constant dense<0.000000e+00> : vector<16x256xf32>
    %17 = tpu.matmul %1, %16, %cst_11 {dimension_numbers = #tpu.dot_dimension_numbers<[1], [0], [0], [1], [0, 0, 1, 1], [], []>} : vector<16x32xf32>, vector<32x256xf32>, vector<16x256xf32> -> vector<16x256xf32>
    %18 = vector.broadcast %2 : vector<16x1xf32> to vector<16x256xf32>
    %19 = arith.mulf %17, %18 : vector<16x256xf32>
    %20 = vector.broadcast %3 : vector<16x1xf32> to vector<16x256xf32>
    %21 = arith.addf %19, %20 : vector<16x256xf32>
    %cst_12 = arith.constant 0.000000e+00 : f32
    %22 = vector.broadcast %cst_12 : f32 to vector<16x256xf32>
    %23 = arith.maximumf %21, %22 : vector<16x256xf32>
    %24 = arith.maximumf %13, %23 : vector<16x256xf32>
    %c2 = arith.constant 2 : index
    %c0_13 = arith.constant 0 : index
    %c0_14 = arith.constant 0 : index
    %25 = vector.load %arg1[%c2, %c0_13, %c0_14] : memref<4x32x256xbf16, #tpu.memory_space<vmem>>, vector<1x32x256xbf16>
    %26 = vector.shape_cast %25 : vector<1x32x256xbf16> to vector<32x256xbf16>
    %27 = arith.extf %26 : vector<32x256xbf16> to vector<32x256xf32>
    %cst_15 = arith.constant dense<0.000000e+00> : vector<16x256xf32>
    %28 = tpu.matmul %1, %27, %cst_15 {dimension_numbers = #tpu.dot_dimension_numbers<[1], [0], [0], [1], [0, 0, 1, 1], [], []>} : vector<16x32xf32>, vector<32x256xf32>, vector<16x256xf32> -> vector<16x256xf32>
    %29 = vector.broadcast %2 : vector<16x1xf32> to vector<16x256xf32>
    %30 = arith.mulf %28, %29 : vector<16x256xf32>
    %31 = vector.broadcast %3 : vector<16x1xf32> to vector<16x256xf32>
    %32 = arith.addf %30, %31 : vector<16x256xf32>
    %cst_16 = arith.constant 0.000000e+00 : f32
    %33 = vector.broadcast %cst_16 : f32 to vector<16x256xf32>
    %34 = arith.maximumf %32, %33 : vector<16x256xf32>
    %35 = arith.maximumf %24, %34 : vector<16x256xf32>
    %c3 = arith.constant 3 : index
    %c0_17 = arith.constant 0 : index
    %c0_18 = arith.constant 0 : index
    %36 = vector.load %arg1[%c3, %c0_17, %c0_18] : memref<4x32x256xbf16, #tpu.memory_space<vmem>>, vector<1x32x256xbf16>
    %37 = vector.shape_cast %36 : vector<1x32x256xbf16> to vector<32x256xbf16>
    %38 = arith.extf %37 : vector<32x256xbf16> to vector<32x256xf32>
    %cst_19 = arith.constant dense<0.000000e+00> : vector<16x256xf32>
    %39 = tpu.matmul %1, %38, %cst_19 {dimension_numbers = #tpu.dot_dimension_numbers<[1], [0], [0], [1], [0, 0, 1, 1], [], []>} : vector<16x32xf32>, vector<32x256xf32>, vector<16x256xf32> -> vector<16x256xf32>
    %40 = vector.broadcast %2 : vector<16x1xf32> to vector<16x256xf32>
    %41 = arith.mulf %39, %40 : vector<16x256xf32>
    %42 = vector.broadcast %3 : vector<16x1xf32> to vector<16x256xf32>
    %43 = arith.addf %41, %42 : vector<16x256xf32>
    %cst_20 = arith.constant 0.000000e+00 : f32
    %44 = vector.broadcast %cst_20 : f32 to vector<16x256xf32>
    %45 = arith.maximumf %43, %44 : vector<16x256xf32>
    %46 = arith.maximumf %35, %45 : vector<16x256xf32>
    %47 = arith.truncf %46 : vector<16x256xf32> to vector<16x256xbf16>
    %c0_21 = arith.constant 0 : index
    %c0_22 = arith.constant 0 : index
    %48 = vector.load %arg5[%c0_21, %c0_22] : memref<16x256xbf16, #tpu.memory_space<vmem>>, vector<16x256xbf16>
    tpu.vector_store %arg5[%c0_21, %c0_22], %47 {strides = array<i32>} : memref<16x256xbf16, #tpu.memory_space<vmem>>, vector<16x256xbf16>,
    return
  }
  func.func @transform_0(%arg0: i32) -> (i32, i32, i32) {
    %c0_i32 = arith.constant 0 : i32
    %c0_i32_0 = arith.constant 0 : i32
    %c0_i32_1 = arith.constant 0 : i32
    return %c0_i32, %c0_i32_0, %arg0 : i32, i32, i32
  }
  func.func @transform_1(%arg0: i32) -> (i32, i32) {
    %c0_i32 = arith.constant 0 : i32
    %c0_i32_0 = arith.constant 0 : i32
    %c0_i32_1 = arith.constant 0 : i32
    return %c0_i32, %c0_i32_0 : i32, i32
  }
  func.func @transform_2(%arg0: i32) -> (i32, i32) {
    %c0_i32 = arith.constant 0 : i32
    %c0_i32_0 = arith.constant 0 : i32
    %c0_i32_1 = arith.constant 0 : i32
    return %c0_i32, %c0_i32_0 : i32, i32
  }
  func.func @transform_3(%arg0: i32) -> (i32, i32) {
    %c0_i32 = arith.constant 0 : i32
    %c0_i32_0 = arith.constant 0 : i32
    %c0_i32_1 = arith.constant 0 : i32
    return %c0_i32, %c0_i32_0 : i32, i32
  }
  func.func @transform_4(%arg0: i32) -> (i32, i32) {
    %c0_i32 = arith.constant 0 : i32
    %c0_i32_0 = arith.constant 0 : i32
    return %c0_i32, %arg0 : i32, i32
  }
}

module attributes {stable_mosaic.version = 11 : i64} {
  func.func @conv_bn_relu_pool_kernel(%arg0: i32, %arg1: memref<4x400x128xbf16, #tpu.memory_space<vmem>>, %arg2: memref<32x400xbf16, #tpu.memory_space<vmem>>, %arg3: memref<32x1xf32, #tpu.memory_space<vmem>>, %arg4: memref<32x1xf32, #tpu.memory_space<vmem>>, %arg5: memref<32x128xbf16, #tpu.memory_space<vmem>>) attributes {dimension_semantics = [#tpu.dimension_semantics<parallel>], iteration_bounds = array<i64: 1>, scalar_prefetch = 0 : i64, scratch_operands = 0 : i64, tpu.core_type = #tpu.core_type<tc>, window_params = [{transform_indices = @transform_0, window_bounds = array<i64: 4, 400, 128>}, {pipeline_mode = #tpu.pipeline_mode<synchronous>, transform_indices = @transform_1, window_bounds = array<i64: 32, 400>}, {pipeline_mode = #tpu.pipeline_mode<synchronous>, transform_indices = @transform_2, window_bounds = array<i64: 32, 1>}, {pipeline_mode = #tpu.pipeline_mode<synchronous>, transform_indices = @transform_3, window_bounds = array<i64: 32, 1>}, {transform_indices = @transform_4, window_bounds = array<i64: 32, 128>}]} {
    %c0 = arith.constant 0 : index
    %c0_0 = arith.constant 0 : index
    %0 = vector.load %arg2[%c0, %c0_0] : memref<32x400xbf16, #tpu.memory_space<vmem>>, vector<32x400xbf16>
    %1 = arith.extf %0 : vector<32x400xbf16> to vector<32x400xf32>
    %c0_1 = arith.constant 0 : index
    %c0_2 = arith.constant 0 : index
    %2 = vector.load %arg3[%c0_1, %c0_2] : memref<32x1xf32, #tpu.memory_space<vmem>>, vector<32x1xf32>
    %c0_3 = arith.constant 0 : index
    %c0_4 = arith.constant 0 : index
    %3 = vector.load %arg4[%c0_3, %c0_4] : memref<32x1xf32, #tpu.memory_space<vmem>>, vector<32x1xf32>
    %c0_5 = arith.constant 0 : index
    %c0_6 = arith.constant 0 : index
    %c0_7 = arith.constant 0 : index
    %4 = vector.load %arg1[%c0_5, %c0_6, %c0_7] : memref<4x400x128xbf16, #tpu.memory_space<vmem>>, vector<1x400x128xbf16>
    %5 = vector.shape_cast %4 : vector<1x400x128xbf16> to vector<400x128xbf16>
    %6 = arith.extf %5 : vector<400x128xbf16> to vector<400x128xf32>
    %cst = arith.constant dense<0.000000e+00> : vector<32x128xf32>
    %7 = tpu.matmul %1, %6, %cst {dimension_numbers = #tpu.dot_dimension_numbers<[1], [0], [0], [1], [0, 0, 1, 1], [], []>} : vector<32x400xf32>, vector<400x128xf32>, vector<32x128xf32> -> vector<32x128xf32>
    %8 = vector.broadcast %2 : vector<32x1xf32> to vector<32x128xf32>
    %9 = arith.mulf %7, %8 : vector<32x128xf32>
    %10 = vector.broadcast %3 : vector<32x1xf32> to vector<32x128xf32>
    %11 = arith.addf %9, %10 : vector<32x128xf32>
    %cst_8 = arith.constant 0.000000e+00 : f32
    %12 = vector.broadcast %cst_8 : f32 to vector<32x128xf32>
    %13 = arith.maximumf %11, %12 : vector<32x128xf32>
    %c1 = arith.constant 1 : index
    %c0_9 = arith.constant 0 : index
    %c0_10 = arith.constant 0 : index
    %14 = vector.load %arg1[%c1, %c0_9, %c0_10] : memref<4x400x128xbf16, #tpu.memory_space<vmem>>, vector<1x400x128xbf16>
    %15 = vector.shape_cast %14 : vector<1x400x128xbf16> to vector<400x128xbf16>
    %16 = arith.extf %15 : vector<400x128xbf16> to vector<400x128xf32>
    %cst_11 = arith.constant dense<0.000000e+00> : vector<32x128xf32>
    %17 = tpu.matmul %1, %16, %cst_11 {dimension_numbers = #tpu.dot_dimension_numbers<[1], [0], [0], [1], [0, 0, 1, 1], [], []>} : vector<32x400xf32>, vector<400x128xf32>, vector<32x128xf32> -> vector<32x128xf32>
    %18 = vector.broadcast %2 : vector<32x1xf32> to vector<32x128xf32>
    %19 = arith.mulf %17, %18 : vector<32x128xf32>
    %20 = vector.broadcast %3 : vector<32x1xf32> to vector<32x128xf32>
    %21 = arith.addf %19, %20 : vector<32x128xf32>
    %cst_12 = arith.constant 0.000000e+00 : f32
    %22 = vector.broadcast %cst_12 : f32 to vector<32x128xf32>
    %23 = arith.maximumf %21, %22 : vector<32x128xf32>
    %24 = arith.maximumf %13, %23 : vector<32x128xf32>
    %c2 = arith.constant 2 : index
    %c0_13 = arith.constant 0 : index
    %c0_14 = arith.constant 0 : index
    %25 = vector.load %arg1[%c2, %c0_13, %c0_14] : memref<4x400x128xbf16, #tpu.memory_space<vmem>>, vector<1x400x128xbf16>
    %26 = vector.shape_cast %25 : vector<1x400x128xbf16> to vector<400x128xbf16>
    %27 = arith.extf %26 : vector<400x128xbf16> to vector<400x128xf32>
    %cst_15 = arith.constant dense<0.000000e+00> : vector<32x128xf32>
    %28 = tpu.matmul %1, %27, %cst_15 {dimension_numbers = #tpu.dot_dimension_numbers<[1], [0], [0], [1], [0, 0, 1, 1], [], []>} : vector<32x400xf32>, vector<400x128xf32>, vector<32x128xf32> -> vector<32x128xf32>
    %29 = vector.broadcast %2 : vector<32x1xf32> to vector<32x128xf32>
    %30 = arith.mulf %28, %29 : vector<32x128xf32>
    %31 = vector.broadcast %3 : vector<32x1xf32> to vector<32x128xf32>
    %32 = arith.addf %30, %31 : vector<32x128xf32>
    %cst_16 = arith.constant 0.000000e+00 : f32
    %33 = vector.broadcast %cst_16 : f32 to vector<32x128xf32>
    %34 = arith.maximumf %32, %33 : vector<32x128xf32>
    %35 = arith.maximumf %24, %34 : vector<32x128xf32>
    %c3 = arith.constant 3 : index
    %c0_17 = arith.constant 0 : index
    %c0_18 = arith.constant 0 : index
    %36 = vector.load %arg1[%c3, %c0_17, %c0_18] : memref<4x400x128xbf16, #tpu.memory_space<vmem>>, vector<1x400x128xbf16>
    %37 = vector.shape_cast %36 : vector<1x400x128xbf16> to vector<400x128xbf16>
    %38 = arith.extf %37 : vector<400x128xbf16> to vector<400x128xf32>
    %cst_19 = arith.constant dense<0.000000e+00> : vector<32x128xf32>
    %39 = tpu.matmul %1, %38, %cst_19 {dimension_numbers = #tpu.dot_dimension_numbers<[1], [0], [0], [1], [0, 0, 1, 1], [], []>} : vector<32x400xf32>, vector<400x128xf32>, vector<32x128xf32> -> vector<32x128xf32>
    %40 = vector.broadcast %2 : vector<32x1xf32> to vector<32x128xf32>
    %41 = arith.mulf %39, %40 : vector<32x128xf32>
    %42 = vector.broadcast %3 : vector<32x1xf32> to vector<32x128xf32>
    %43 = arith.addf %41, %42 : vector<32x128xf32>
    %cst_20 = arith.constant 0.000000e+00 : f32
    %44 = vector.broadcast %cst_20 : f32 to vector<32x128xf32>
    %45 = arith.maximumf %43, %44 : vector<32x128xf32>
    %46 = arith.maximumf %35, %45 : vector<32x128xf32>
    %47 = arith.truncf %46 : vector<32x128xf32> to vector<32x128xbf16>
    %c0_21 = arith.constant 0 : index
    %c0_22 = arith.constant 0 : index
    %48 = vector.load %arg5[%c0_21, %c0_22] : memref<32x128xbf16, #tpu.memory_space<vmem>>, vector<32x128xbf16>
    tpu.vector_store %arg5[%c0_21, %c0_22], %47 {strides = array<i32>} : memref<32x128xbf16, #tpu.memory_space<vmem>>, vector<32x128xbf16>,
    return
  }
  func.func @transform_0(%arg0: i32) -> (i32, i32, i32) {
    %c0_i32 = arith.constant 0 : i32
    %c0_i32_0 = arith.constant 0 : i32
    %c0_i32_1 = arith.constant 0 : i32
    return %c0_i32, %c0_i32_0, %arg0 : i32, i32, i32
  }
  func.func @transform_1(%arg0: i32) -> (i32, i32) {
    %c0_i32 = arith.constant 0 : i32
    %c0_i32_0 = arith.constant 0 : i32
    %c0_i32_1 = arith.constant 0 : i32
    return %c0_i32, %c0_i32_0 : i32, i32
  }
  func.func @transform_2(%arg0: i32) -> (i32, i32) {
    %c0_i32 = arith.constant 0 : i32
    %c0_i32_0 = arith.constant 0 : i32
    %c0_i32_1 = arith.constant 0 : i32
    return %c0_i32, %c0_i32_0 : i32, i32
  }
  func.func @transform_3(%arg0: i32) -> (i32, i32) {
    %c0_i32 = arith.constant 0 : i32
    %c0_i32_0 = arith.constant 0 : i32
    %c0_i32_1 = arith.constant 0 : i32
    return %c0_i32, %c0_i32_0 : i32, i32
  }
  func.func @transform_4(%arg0: i32) -> (i32, i32) {
    %c0_i32 = arith.constant 0 : i32
    %c0_i32_0 = arith.constant 0 : i32
    return %c0_i32, %arg0 : i32, i32
  }
}

module attributes {stable_mosaic.version = 11 : i64} {
  func.func @fc_kernel(%arg0: i32, %arg1: memref<8x1568xbf16, #tpu.memory_space<vmem>>, %arg2: memref<1568x128xbf16, #tpu.memory_space<vmem>>, %arg3: memref<1x128xf32, #tpu.memory_space<vmem>>, %arg4: memref<8x128xf32, #tpu.memory_space<vmem>>) attributes {dimension_semantics = [#tpu.dimension_semantics<parallel>], iteration_bounds = array<i64: 1>, scalar_prefetch = 0 : i64, scratch_operands = 0 : i64, tpu.core_type = #tpu.core_type<tc>, window_params = [{transform_indices = @transform_0, window_bounds = array<i64: 8, 1568>}, {pipeline_mode = #tpu.pipeline_mode<synchronous>, transform_indices = @transform_1, window_bounds = array<i64: 1568, 128>}, {pipeline_mode = #tpu.pipeline_mode<synchronous>, transform_indices = @transform_2, window_bounds = array<i64: 1, 128>}, {transform_indices = @transform_3, window_bounds = array<i64: 8, 128>}]} {
    %c0 = arith.constant 0 : index
    %c0_0 = arith.constant 0 : index
    %0 = vector.load %arg1[%c0, %c0_0] : memref<8x1568xbf16, #tpu.memory_space<vmem>>, vector<8x1568xbf16>
    %1 = arith.extf %0 : vector<8x1568xbf16> to vector<8x1568xf32>
    %c0_1 = arith.constant 0 : index
    %c0_2 = arith.constant 0 : index
    %2 = vector.load %arg2[%c0_1, %c0_2] : memref<1568x128xbf16, #tpu.memory_space<vmem>>, vector<1568x128xbf16>
    %3 = arith.extf %2 : vector<1568x128xbf16> to vector<1568x128xf32>
    %cst = arith.constant dense<0.000000e+00> : vector<8x128xf32>
    %4 = tpu.matmul %1, %3, %cst {dimension_numbers = #tpu.dot_dimension_numbers<[1], [0], [0], [1], [0, 0, 1, 1], [], []>} : vector<8x1568xf32>, vector<1568x128xf32>, vector<8x128xf32> -> vector<8x128xf32>
    %c0_3 = arith.constant 0 : index
    %c0_4 = arith.constant 0 : index
    %5 = vector.load %arg3[%c0_3, %c0_4] : memref<1x128xf32, #tpu.memory_space<vmem>>, vector<1x128xf32>
    %6 = vector.broadcast %5 : vector<1x128xf32> to vector<8x128xf32>
    %7 = arith.addf %4, %6 : vector<8x128xf32>
    %c0_5 = arith.constant 0 : index
    %c0_6 = arith.constant 0 : index
    %8 = vector.load %arg4[%c0_5, %c0_6] : memref<8x128xf32, #tpu.memory_space<vmem>>, vector<8x128xf32>
    tpu.vector_store %arg4[%c0_5, %c0_6], %7 {strides = array<i32>} : memref<8x128xf32, #tpu.memory_space<vmem>>, vector<8x128xf32>,
    return
  }
  func.func @transform_0(%arg0: i32) -> (i32, i32) {
    %c0_i32 = arith.constant 0 : i32
    %c0_i32_0 = arith.constant 0 : i32
    return %arg0, %c0_i32 : i32, i32
  }
  func.func @transform_1(%arg0: i32) -> (i32, i32) {
    %c0_i32 = arith.constant 0 : i32
    %c0_i32_0 = arith.constant 0 : i32
    %c0_i32_1 = arith.constant 0 : i32
    return %c0_i32, %c0_i32_0 : i32, i32
  }
  func.func @transform_2(%arg0: i32) -> (i32, i32) {
    %c0_i32 = arith.constant 0 : i32
    %c0_i32_0 = arith.constant 0 : i32
    %c0_i32_1 = arith.constant 0 : i32
    return %c0_i32, %c0_i32_0 : i32, i32
  }
  func.func @transform_3(%arg0: i32) -> (i32, i32) {
    %c0_i32 = arith.constant 0 : i32
    %c0_i32_0 = arith.constant 0 : i32
    return %arg0, %c0_i32 : i32, i32
  }
}

</mosaic_0001>

<llo_original>
// kernel: convnet_forward.3
$region0: #{convnet_forward.3}
  #allocation0 [shape = 'u32[]', space=smem, size = 0x4, offset = 0x4, fixed_abs, tag = 'smem constant byte address 0x4 - core index']
  #allocation1 [shape = 'u32[72,128]{1,0:T(1,128)}', space=vmem, size = 0x9000, scoped, tag = 'internal scratch']
  %s0 = inlined_call_operand.vmem [shape: bf16[4,32,512], index: 0, kind: input, shape index: {}]
  %s1 = inlined_call_operand.vmem [shape: bf16[16,32], index: 1, kind: input, shape index: {}]
  %s2 = inlined_call_operand.vmem [shape: f32[16,1], index: 2, kind: input, shape index: {}]
  %s3 = inlined_call_operand.vmem [shape: f32[16,1], index: 3, kind: input, shape index: {}]
  %s4 = inlined_call_operand.vmem [shape: bf16[16,512], index: 4, kind: output, shape index: {}]
  %s5 = sld [smem:[#allocation0]]
  $region121: #{convnet_forward.3} parent=0
    _
  %s7 = ssub.s32 1, %s5
  %s8 = scalar_select 0, %s7, %s5
  $region1: #{convnet_forward.3} parent=0
    #allocation2 [shape = 'u8[131072]{0}', space=vmem, size = 0x20000, scoped, tag = 'input window, operand 0']
    #allocation3 [shape = 'u8[16384]{0}', space=vmem, size = 0x4000, scoped, tag = 'output window, operand 0']
    loop: start=0, step=1, limit=4
    $region2: #{convnet_forward.3} parent=1 // loop_pre_header
      _
    $region3: #{convnet_forward.3} parent=1 // loop_header
      %s10 = sphi 0, %s14
      %p11 = scmp.ge.s32.totalorder %s10, 4
      %s20 = sphi 0, %s22
      %s23 = sphi 0, %s20
      %s24 = sphi 0, %s23
      %s40 = sphi 0, %s24
      %s44 = sphi 0, %s44
      %s46 = sphi 0, %s44
      %s47 = sphi 0, %s46
      %s61 = sphi 0, %s47
      %s65 = sphi 0, %s65
      %s67 = sphi 0, %s65
      %s68 = sphi 0, %s67
      %s82 = sphi 0, %s68
      %s86 = sphi 0, %s86
      %s88 = sphi 0, %s86
      %s89 = sphi 0, %s88
      %s103 = sphi 0, %s89
      %s109 = sphi 0, %s111
      %s112 = sphi 0, %s109
      %s113 = sphi 0, %s112
      %s129 = sphi 0, %s113
    $region4: #{convnet_forward.3} parent=1 // loop_header_branch
      %13 = sbr.rel (%p11) target = $region8
    $region5: #{convnet_forward.3} parent=1 // loop_body
      %s15 = ssub.s32 %s10, 1
      %s16 = ssub.s32 %s10, 2
      %s17 = sadd.s32 %s10, 1
      %s18 = ssub.s32 %s10, %s17
      %p19 = scmp.eq.s32.totalorder %s18, 0
      %s21 = sadd.s32 %s20, 1
      %s22 = scalar_select %p19, %s20, %s21
      %p25 = pneg %p19
      %p26 = scmp.eq.s32.totalorder %s10, 1
      %p27 = por %p25, %p26
      %p28 = scmp.ne.s32.totalorder %s20, %s23
      %p29 = scmp.eq.s32.totalorder %s10, 0
      %p30 = por %p28, %p29
      %p31 = scmp.ne.s32.totalorder %s20, %s23
      %p32 = scmp.eq.s32.totalorder %s15, 1
      %p33 = por %p31, %p32
      %p34 = scmp.ne.s32.totalorder %s23, %s24
      %p35 = scmp.eq.s32.totalorder %s15, 0
      %p36 = por %p34, %p35
      %p37 = scmp.ne.s32.totalorder %s23, %s24
      %p38 = scmp.eq.s32.totalorder %s16, 1
      %p39 = por %p37, %p38
      %p41 = scmp.ne.s32.totalorder %s24, %s40
      %p42 = scmp.eq.s32.totalorder %s16, 0
      %p43 = por %p41, %p42
      %s45 = sadd.s32 %s44, 1
      %p48 = scmp.eq.s32.totalorder %s10, 1
      %p49 = scmp.ne.s32.totalorder %s44, %s46
      %p50 = scmp.eq.s32.totalorder %s10, 0
      %p51 = por %p49, %p50
      %p52 = scmp.ne.s32.totalorder %s44, %s46
      %p53 = scmp.eq.s32.totalorder %s15, 1
      %p54 = por %p52, %p53
      %p55 = scmp.ne.s32.totalorder %s46, %s47
      %p56 = scmp.eq.s32.totalorder %s15, 0
      %p57 = por %p55, %p56
      %p58 = scmp.ne.s32.totalorder %s46, %s47
      %p59 = scmp.eq.s32.totalorder %s16, 1
      %p60 = por %p58, %p59
      %p62 = scmp.ne.s32.totalorder %s47, %s61
      %p63 = scmp.eq.s32.totalorder %s16, 0
      %p64 = por %p62, %p63
      %s66 = sadd.s32 %s65, 1
      %p69 = scmp.eq.s32.totalorder %s10, 1
      %p70 = scmp.ne.s32.totalorder %s65, %s67
      %p71 = scmp.eq.s32.totalorder %s10, 0
      %p72 = por %p70, %p71
      %p73 = scmp.ne.s32.totalorder %s65, %s67
      %p74 = scmp.eq.s32.totalorder %s15, 1
      %p75 = por %p73, %p74
      %p76 = scmp.ne.s32.totalorder %s67, %s68
      %p77 = scmp.eq.s32.totalorder %s15, 0
      %p78 = por %p76, %p77
      %p79 = scmp.ne.s32.totalorder %s67, %s68
      %p80 = scmp.eq.s32.totalorder %s16, 1
      %p81 = por %p79, %p80
      %p83 = scmp.ne.s32.totalorder %s68, %s82
      %p84 = scmp.eq.s32.totalorder %s16, 0
      %p85 = por %p83, %p84
      %s87 = sadd.s32 %s86, 1
      %p90 = scmp.eq.s32.totalorder %s10, 1
      %p91 = scmp.ne.s32.totalorder %s86, %s88
      %p92 = scmp.eq.s32.totalorder %s10, 0
      %p93 = por %p91, %p92
      %p94 = scmp.ne.s32.totalorder %s86, %s88
      %p95 = scmp.eq.s32.totalorder %s15, 1
      %p96 = por %p94, %p95
      %p97 = scmp.ne.s32.totalorder %s88, %s89
      %p98 = scmp.eq.s32.totalorder %s15, 0
      %p99 = por %p97, %p98
      %p100 = scmp.ne.s32.totalorder %s88, %s89
      %p101 = scmp.eq.s32.totalorder %s16, 1
      %p102 = por %p100, %p101
      %p104 = scmp.ne.s32.totalorder %s89, %s103
      %p105 = scmp.eq.s32.totalorder %s16, 0
      %p106 = por %p104, %p105
      %s107 = ssub.s32 %s10, %s17
      %p108 = scmp.eq.s32.totalorder %s107, 0
      %s110 = sadd.s32 %s109, 1
      %s111 = scalar_select %p108, %s109, %s110
      %p114 = pneg %p108
      %p115 = scmp.eq.s32.totalorder %s10, 1
      %p116 = por %p114, %p115
      %p117 = scmp.ne.s32.totalorder %s109, %s112
      %p118 = scmp.eq.s32.totalorder %s10, 0
      %p119 = por %p117, %p118
      %p120 = scmp.ne.s32.totalorder %s109, %s112
      %p121 = scmp.eq.s32.totalorder %s15, 1
      %p122 = por %p120, %p121
      %p123 = scmp.ne.s32.totalorder %s112, %s113
      %p124 = scmp.eq.s32.totalorder %s15, 0
      %p125 = por %p123, %p124
      %p126 = scmp.ne.s32.totalorder %s112, %s113
      %p127 = scmp.eq.s32.totalorder %s16, 1
      %p128 = por %p126, %p127
      %p130 = scmp.ne.s32.totalorder %s113, %s129
      %p131 = scmp.eq.s32.totalorder %s16, 0
      %p132 = por %p130, %p131
      %p133 = scmp.le.s32.totalorder 1, %s10
      %p134 = scmp.lt.s32.totalorder %s10, 3
      %p135 = pnand %p133, %p134
      %p136 = pneg %p135
      // Predicated region
      $region9: #{convnet_forward.3} parent=5 // pred_check
        _
      $region10: #{convnet_forward.3} parent=5 // pred_check_branch
        %138 = sbr.rel (%p135) target = $region12
      $region11: #{convnet_forward.3} parent=5 // pred_region
        %s139 = ssub.s32 %s10, 1
        // Predicated region
        $region13: #{convnet_forward.3} parent=11 // pred_check
          %p140 = pneg %p57
        $region14: #{convnet_forward.3} parent=11 // pred_check_branch
          %142 = sbr.rel (%p140) target = $region16
        $region15: #{convnet_forward.3} parent=11 // pred_region
          _
        $region16: #{convnet_forward.3} parent=11 // pred_fallthru
          _
        // Predicated region
        $region17: #{convnet_forward.3} parent=11 // pred_check
          %p143 = pneg %p78
        $region18: #{convnet_forward.3} parent=11 // pred_check_branch
          %145 = sbr.rel (%p143) target = $region20
        $region19: #{convnet_forward.3} parent=11 // pred_region
          _
        $region20: #{convnet_forward.3} parent=11 // pred_fallthru
          _
        // Predicated region
        $region21: #{convnet_forward.3} parent=11 // pred_check
          %p146 = pneg %p99
        $region22: #{convnet_forward.3} parent=11 // pred_check_branch
          %148 = sbr.rel (%p146) target = $region24
        $region23: #{convnet_forward.3} parent=11 // pred_region
          _
        $region24: #{convnet_forward.3} parent=11 // pred_fallthru
          _
      $region12: #{convnet_forward.3} parent=5 // pred_fallthru
        _
      %p149 = scmp.lt.s32.totalorder %s10, 2
      // Predicated region
      $region25: #{convnet_forward.3} parent=5 // pred_check
        %p150 = pneg %p149
      $region26: #{convnet_forward.3} parent=5 // pred_check_branch
        %152 = sbr.rel (%p150) target = $region28
      $region27: #{convnet_forward.3} parent=5 // pred_region
        // Predicated region
        $region29: #{convnet_forward.3} parent=27 // pred_check
          %p153 = pneg %p30
        $region30: #{convnet_forward.3} parent=27 // pred_check_branch
          %155 = sbr.rel (%p153) target = $region32
        $region31: #{convnet_forward.3} parent=27 // pred_region
          %s156 = sand.u32 %s20, 1
          %s157 = sand.u32 %s20, 1
          %s158 = smul.addr %s157, 128
          %s159 = scalar_lea.vmem [#allocation2], %s158
          %s160 = smul.u32 2, %s10
          %s161 = smul.addr %s160, 4
          %s162 = scalar_lea.vmem %s0, %s161
          // Predicated region
          $region33: #{convnet_forward.3} parent=31 // pred_check
            _
          $region34: #{convnet_forward.3} parent=31 // pred_check_branch
            %164 = sbr.rel (0) target = $region36
          $region35: #{convnet_forward.3} parent=31 // pred_region
            // Predicated region
            $region37: #{convnet_forward.3} parent=35 // pred_check
              _
            $region38: #{convnet_forward.3} parent=35 // pred_check_branch
              %166 = sbr.rel (0) target = $region40
            $region39: #{convnet_forward.3} parent=35 // pred_region
              // Predicated region
              $region52: #{convnet_forward.3} parent=39 // pred_check
                _
              $region53: #{convnet_forward.3} parent=39 // pred_check_branch
                %212 = sbr.rel (0) target = $region55
              $region54: #{convnet_forward.3} parent=39 // pred_region
                loop: start=0, step=1, limit=1
                $region56: #{convnet_forward.3} parent=54 // loop_pre_header
                  _
                $region57: #{convnet_forward.3} parent=54 // loop_header
                  %s214 = sphi 0, %s218
                  %p215 = scmp.ge.s32.totalorder %s214, 1
                  %s219 = sphi %s162, %s162
                  %s220 = sphi %s159, %s159
                $region58: #{convnet_forward.3} parent=54 // loop_header_branch
                  %217 = sbr.rel (%p215) target = $region62
                $region59: #{convnet_forward.3} parent=54 // loop_body
                  %v221 = vld [vmem:[%s219] sm:$0xff]
                  %222 = vst [vmem:[%s220] sm:$0xff] %v221
                  %v223 = vld [vmem:[%s219 + $0x10] sm:$0xff]
                  %224 = vst [vmem:[%s220 + $0x8] sm:$0xff] %v223
                  %v225 = vld [vmem:[%s219 + $0x20] sm:$0xff]
                  %226 = vst [vmem:[%s220 + $0x10] sm:$0xff] %v225
                  %v227 = vld [vmem:[%s219 + $0x30] sm:$0xff]
                  %228 = vst [vmem:[%s220 + $0x18] sm:$0xff] %v227
                  %v229 = vld [vmem:[%s219 + $0x40] sm:$0xff]
                  %230 = vst [vmem:[%s220 + $0x20] sm:$0xff] %v229
                  %v231 = vld [vmem:[%s219 + $0x50] sm:$0xff]
                  %232 = vst [vmem:[%s220 + $0x28] sm:$0xff] %v231
                  %v233 = vld [vmem:[%s219 + $0x60] sm:$0xff]
                  %234 = vst [vmem:[%s220 + $0x30] sm:$0xff] %v233
                  %v235 = vld [vmem:[%s219 + $0x70] sm:$0xff]
                  %236 = vst [vmem:[%s220 + $0x38] sm:$0xff] %v235
                  %v237 = vld [vmem:[%s219 + $0x80] sm:$0xff]
                  %238 = vst [vmem:[%s220 + $0x40] sm:$0xff] %v237
                  %v239 = vld [vmem:[%s219 + $0x90] sm:$0xff]
                  %240 = vst [vmem:[%s220 + $0x48] sm:$0xff] %v239
                  %v241 = vld [vmem:[%s219 + $0xa0] sm:$0xff]
                  %242 = vst [vmem:[%s220 + $0x50] sm:$0xff] %v241
                  %v243 = vld [vmem:[%s219 + $0xb0] sm:$0xff]
                  %244 = vst [vmem:[%s220 + $0x58] sm:$0xff] %v243
                  %v245 = vld [vmem:[%s219 + $0xc0] sm:$0xff]
                  %246 = vst [vmem:[%s220 + $0x60] sm:$0xff] %v245
                  %v247 = vld [vmem:[%s219 + $0xd0] sm:$0xff]
                  %248 = vst [vmem:[%s220 + $0x68] sm:$0xff] %v247
                  %v249 = vld [vmem:[%s219 + $0xe0] sm:$0xff]
                  %250 = vst [vmem:[%s220 + $0x70] sm:$0xff] %v249
                  %v251 = vld [vmem:[%s219 + $0xf0] sm:$0xff]
                  %252 = vst [vmem:[%s220 + $0x78] sm:$0xff] %v251
                $region60: #{convnet_forward.3} parent=54 // loop_footer
                  %s218 = sadd.s32 1, %s214
                $region61: #{convnet_forward.3} parent=54 // loop_footer_branch
                  %213 = sbr.rel target = $region57
                $region62: #{convnet_forward.3} parent=54 // loop_exit
                  _
              $region55: #{convnet_forward.3} parent=39 // pred_fallthru
                _
              // Predicated region
              $region63: #{convnet_forward.3} parent=39 // pred_check
                _
              $region64: #{convnet_forward.3} parent=39 // pred_check_branch
                %254 = sbr.rel target = $region66
              $region65: #{convnet_forward.3} parent=39 // pred_region
                _
              $region66: #{convnet_forward.3} parent=39 // pred_fallthru
                _
            $region40: #{convnet_forward.3} parent=35 // pred_fallthru
              _
            // Predicated region
            $region41: #{convnet_forward.3} parent=35 // pred_check
              _
            $region42: #{convnet_forward.3} parent=35 // pred_check_branch
              %168 = sbr.rel target = $region44
            $region43: #{convnet_forward.3} parent=35 // pred_region
              %s170 = ssub.s32 256, 1
              loop: start=0, step=1, limit=1
              $region45: #{convnet_forward.3} parent=43 // loop_pre_header
                _
              $region46: #{convnet_forward.3} parent=43 // loop_header
                %s172 = sphi 0, %s176
                %p173 = scmp.ge.s32.totalorder %s172, 1
                %s177 = sphi %s162, %s162
                %s178 = sphi %s159, %s159
              $region47: #{convnet_forward.3} parent=43 // loop_header_branch
                %175 = sbr.rel (%p173) target = $region51
              $region48: #{convnet_forward.3} parent=43 // loop_body
                %v179 = vld [vmem:[%s177] sm:%s170]
                %180 = vst [vmem:[%s178] sm:%s170] %v179
                %v181 = vld [vmem:[%s177 + $0x10] sm:%s170]
                %182 = vst [vmem:[%s178 + $0x8] sm:%s170] %v181
                %v183 = vld [vmem:[%s177 + $0x20] sm:%s170]
                %184 = vst [vmem:[%s178 + $0x10] sm:%s170] %v183
                %v185 = vld [vmem:[%s177 + $0x30] sm:%s170]
                %186 = vst [vmem:[%s178 + $0x18] sm:%s170] %v185
                %v187 = vld [vmem:[%s177 + $0x40] sm:%s170]
                %188 = vst [vmem:[%s178 + $0x20] sm:%s170] %v187
                %v189 = vld [vmem:[%s177 + $0x50] sm:%s170]
                %190 = vst [vmem:[%s178 + $0x28] sm:%s170] %v189
                %v191 = vld [vmem:[%s177 + $0x60] sm:%s170]
                %192 = vst [vmem:[%s178 + $0x30] sm:%s170] %v191
                %v193 = vld [vmem:[%s177 + $0x70] sm:%s170]
                %194 = vst [vmem:[%s178 + $0x38] sm:%s170] %v193
                %v195 = vld [vmem:[%s177 + $0x80] sm:%s170]
                %196 = vst [vmem:[%s178 + $0x40] sm:%s170] %v195
                %v197 = vld [vmem:[%s177 + $0x90] sm:%s170]
                %198 = vst [vmem:[%s178 + $0x48] sm:%s170] %v197
                %v199 = vld [vmem:[%s177 + $0xa0] sm:%s170]
                %200 = vst [vmem:[%s178 + $0x50] sm:%s170] %v199
                %v201 = vld [vmem:[%s177 + $0xb0] sm:%s170]
                %202 = vst [vmem:[%s178 + $0x58] sm:%s170] %v201
                %v203 = vld [vmem:[%s177 + $0xc0] sm:%s170]
                %204 = vst [vmem:[%s178 + $0x60] sm:%s170] %v203
                %v205 = vld [vmem:[%s177 + $0xd0] sm:%s170]
                %206 = vst [vmem:[%s178 + $0x68] sm:%s170] %v205
                %v207 = vld [vmem:[%s177 + $0xe0] sm:%s170]
                %208 = vst [vmem:[%s178 + $0x70] sm:%s170] %v207
                %v209 = vld [vmem:[%s177 + $0xf0] sm:%s170]
                %210 = vst [vmem:[%s178 + $0x78] sm:%s170] %v209
              $region49: #{convnet_forward.3} parent=43 // loop_footer
                %s176 = sadd.s32 1, %s172
              $region50: #{convnet_forward.3} parent=43 // loop_footer_branch
                %171 = sbr.rel target = $region46
              $region51: #{convnet_forward.3} parent=43 // loop_exit
                _
            $region44: #{convnet_forward.3} parent=35 // pred_fallthru
              _
          $region36: #{convnet_forward.3} parent=31 // pred_fallthru
            _
          %255 = vnop
        $region32: #{convnet_forward.3} parent=27 // pred_fallthru
          _
      $region28: #{convnet_forward.3} parent=5 // pred_fallthru
        _
      %p256 = scmp.le.s32.totalorder 1, %s10
      %p257 = scmp.lt.s32.totalorder %s10, 3
      %p258 = pnand %p256, %p257
      %p259 = pneg %p258
      // Predicated region
      $region67: #{convnet_forward.3} parent=5 // pred_check
        _
      $region68: #{convnet_forward.3} parent=5 // pred_check_branch
        %261 = sbr.rel (%p258) target = $region70
      $region69: #{convnet_forward.3} parent=5 // pred_region
        %s262 = ssub.s32 %s10, 1
        %s263 = sand.u32 %s23, 1
        %s264 = sand.u32 %s23, 1
        %s265 = smul.addr %s264, 128
        %s266 = scalar_lea.vmem [#allocation2], %s265
        // Predicated region
        $region71: #{convnet_forward.3} parent=69 // pred_check
          %p267 = pneg %p36
        $region72: #{convnet_forward.3} parent=69 // pred_check_branch
          %269 = sbr.rel (%p267) target = $region74
        $region73: #{convnet_forward.3} parent=69 // pred_region
          _
        $region74: #{convnet_forward.3} parent=69 // pred_fallthru
          _
        %s270 = sand.u32 %s23, 1
        %s271 = sand.u32 %s23, 1
        %s272 = smul.addr %s271, 128
        %s273 = scalar_lea.vmem [#allocation2], %s272
        %p274 = pneg %p36
        %p275 = pneg %p33
        %p276 = pneg %p57
        %p277 = pneg %p54
        %p278 = pneg %p78
        %p279 = pneg %p75
        %p280 = pneg %p99
        %p281 = pneg %p96
        %p282 = pneg %p125
        %p283 = pneg %p122
        %s284 = sand.u32 %s112, 1
        %s285 = sand.u32 %s112, 1
        %s286 = smul.addr %s285, 16
        %s287 = scalar_lea.vmem [#allocation3], %s286
        %s288 = smul.u32 2, %s15
        %s289 = smul.u32 2, %s15
        %v290 = vld [vmem:[%s1] sm:$0xf]
        %v291 = vld [vmem:[%s1 + $0x4] sm:$0xf]
        %v292 = vunpack.c.l.bf16 %v290
        %v293 = vunpack.c.l.bf16 %v291
        %v294 = vld [vmem:[%s2] sm:$0xff]
        %v295 = vld [vmem:[%s2 + $0x8] sm:$0xff]
        %v296 = vld [vmem:[%s3] sm:$0xff]
        %v297 = vld [vmem:[%s3 + $0x8] sm:$0xff]
        %v298 = vld [vmem:[%s266] sm:$0xff]
        %v299 = vld [vmem:[%s266 + $0x8] sm:$0xff]
        %v300 = vld [vmem:[%s266 + $0x10] sm:$0xff]
        %v301 = vld [vmem:[%s266 + $0x18] sm:$0xff]
        %v302 = vunpack.c.l.bf16 %v298
        %v303 = vunpack.c.h.bf16 %v298
        %v304 = vunpack.c.l.bf16 %v299
        %v305 = vunpack.c.h.bf16 %v299
        %v306 = vunpack.c.l.bf16 %v300
        %v307 = vunpack.c.h.bf16 %v300
        %v308 = vunpack.c.l.bf16 %v301
        %v309 = vunpack.c.h.bf16 %v301
        %vm310 = vcmask 261120
        %v312 = vsel %vm310, %v292, 0
        %v315 = vsel %vm310, %v293, 0
        %317 = vmatpush.msra.mxu0 0.0
        %318 = vmatpush.msra.mxu0 0.0
        %319 = vmatpush.msra.mxu0 0.0
        %320 = vmatpush.msra.mxu0 0.0
        %321 = vmatpush.msra.mxu0 0.0
        %322 = vmatpush.msra.mxu0 0.0
        %323 = vmatpush.msra.mxu0 0.0
        %324 = vmatpush.msra.mxu0 0.0
        %325 = vmatpush.msra.mxu0 0.0
        %326 = vmatpush.msra.mxu0 0.0
        %327 = vmatpush.msra.mxu0 0.0
        %328 = vmatpush.msra.mxu0 0.0
        %329 = vmatpush.msra.mxu0 %v308
        %330 = vmatpush.msra.mxu0 %v306
        %331 = vmatpush.msra.mxu0 %v304
        %332 = vmatpush.msra.mxu0 %v302
        %333 = vmatmul.f32.gmra.mxu0 %v312
        %v334 = vpop.f32.mrf.mxu0
        %v335 = vadd.f32 0.0, %v334
        %336 = vmatmul.f32.gmra.mxu0 %v315
        %v337 = vpop.f32.mrf.mxu0
        %v338 = vadd.f32 0.0, %v337
        %339 = vdwg.mxu0
        %340 = vmatpush.msra.mxu0 0.0
        %341 = vmatpush.msra.mxu0 0.0
        %342 = vmatpush.msra.mxu0 0.0
        %343 = vmatpush.msra.mxu0 0.0
        %344 = vmatpush.msra.mxu0 0.0
        %345 = vmatpush.msra.mxu0 0.0
        %346 = vmatpush.msra.mxu0 0.0
        %347 = vmatpush.msra.mxu0 0.0
        %348 = vmatpush.msra.mxu0 0.0
        %349 = vmatpush.msra.mxu0 0.0
        %350 = vmatpush.msra.mxu0 0.0
        %351 = vmatpush.msra.mxu0 0.0
        %352 = vmatpush.msra.mxu0 %v309
        %353 = vmatpush.msra.mxu0 %v307
        %354 = vmatpush.msra.mxu0 %v305
        %355 = vmatpush.msra.mxu0 %v303
        %356 = vmatmul.f32.gmra.mxu0 %v312
        %v357 = vpop.f32.mrf.mxu0
        %v358 = vadd.f32 0.0, %v357
        %359 = vmatmul.f32.gmra.mxu0 %v315
        %v360 = vpop.f32.mrf.mxu0
        %v361 = vadd.f32 0.0, %v360
        %362 = vdwg.mxu0
        %364 = vset.pattern.permute.xlu0 0
        %365 = vperm.xlu0 %364, %v294
        %v366 = vpop.permute.xlu0 %365
        %369 = vset.pattern.permute.xlu0 0
        %370 = vperm.xlu0 %369, %v295
        %v371 = vpop.permute.xlu0 %370
        %v373 = vmul.f32 %v335, %v366
        %v374 = vmul.f32 %v358, %v366
        %v375 = vmul.f32 %v338, %v371
        %v376 = vmul.f32 %v361, %v371
        %378 = vset.pattern.permute.xlu0 0
        %379 = vperm.xlu0 %378, %v296
        %v380 = vpop.permute.xlu0 %379
        %383 = vset.pattern.permute.xlu0 0
        %384 = vperm.xlu0 %383, %v297
        %v385 = vpop.permute.xlu0 %384
        %v387 = vadd.f32 %v373, %v380
        %v388 = vadd.f32 %v374, %v380
        %v389 = vadd.f32 %v375, %v385
        %v390 = vadd.f32 %v376, %v385
        %v391 = vmax.f32 %v387, 0.0
        %v392 = vmax.f32 %v388, 0.0
        %v393 = vmax.f32 %v389, 0.0
        %v394 = vmax.f32 %v390, 0.0
        %s395 = scalar_lea.vmem %s266, 32 [#allocation2]
        %v396 = vld [vmem:[%s395] sm:$0xff]
        %v397 = vld [vmem:[%s395 + $0x8] sm:$0xff]
        %v398 = vld [vmem:[%s395 + $0x10] sm:$0xff]
        %v399 = vld [vmem:[%s395 + $0x18] sm:$0xff]
        %v400 = vunpack.c.l.bf16 %v396
        %v401 = vunpack.c.h.bf16 %v396
        %v402 = vunpack.c.l.bf16 %v397
        %v403 = vunpack.c.h.bf16 %v397
        %v404 = vunpack.c.l.bf16 %v398
        %v405 = vunpack.c.h.bf16 %v398
        %v406 = vunpack.c.l.bf16 %v399
        %v407 = vunpack.c.h.bf16 %v399
        %408 = vmatpush.msra.mxu0 0.0
        %409 = vmatpush.msra.mxu0 0.0
        %410 = vmatpush.msra.mxu0 0.0
        %411 = vmatpush.msra.mxu0 0.0
        %412 = vmatpush.msra.mxu0 0.0
        %413 = vmatpush.msra.mxu0 0.0
        %414 = vmatpush.msra.mxu0 0.0
        %415 = vmatpush.msra.mxu0 0.0
        %416 = vmatpush.msra.mxu0 0.0
        %417 = vmatpush.msra.mxu0 0.0
        %418 = vmatpush.msra.mxu0 0.0
        %419 = vmatpush.msra.mxu0 0.0
        %420 = vmatpush.msra.mxu0 %v406
        %421 = vmatpush.msra.mxu0 %v404
        %422 = vmatpush.msra.mxu0 %v402
        %423 = vmatpush.msra.mxu0 %v400
        %424 = vmatmul.f32.gmra.mxu0 %v312
        %v425 = vpop.f32.mrf.mxu0
        %v426 = vadd.f32 0.0, %v425
        %427 = vmatmul.f32.gmra.mxu0 %v315
        %v428 = vpop.f32.mrf.mxu0
        %v429 = vadd.f32 0.0, %v428
        %430 = vdwg.mxu0
        %431 = vmatpush.msra.mxu0 0.0
        %432 = vmatpush.msra.mxu0 0.0
        %433 = vmatpush.msra.mxu0 0.0
        %434 = vmatpush.msra.mxu0 0.0
        %435 = vmatpush.msra.mxu0 0.0
        %436 = vmatpush.msra.mxu0 0.0
        %437 = vmatpush.msra.mxu0 0.0
        %438 = vmatpush.msra.mxu0 0.0
        %439 = vmatpush.msra.mxu0 0.0
        %440 = vmatpush.msra.mxu0 0.0
        %441 = vmatpush.msra.mxu0 0.0
        %442 = vmatpush.msra.mxu0 0.0
        %443 = vmatpush.msra.mxu0 %v407
        %444 = vmatpush.msra.mxu0 %v405
        %445 = vmatpush.msra.mxu0 %v403
        %446 = vmatpush.msra.mxu0 %v401
        %447 = vmatmul.f32.gmra.mxu0 %v312
        %v448 = vpop.f32.mrf.mxu0
        %v449 = vadd.f32 0.0, %v448
        %450 = vmatmul.f32.gmra.mxu0 %v315
        %v451 = vpop.f32.mrf.mxu0
        %v452 = vadd.f32 0.0, %v451
        %453 = vdwg.mxu0
        %v454 = vmul.f32 %v426, %v366
        %v455 = vmul.f32 %v449, %v366
        %v456 = vmul.f32 %v429, %v371
        %v457 = vmul.f32 %v452, %v371
        %v458 = vadd.f32 %v454, %v380
        %v459 = vadd.f32 %v455, %v380
        %v460 = vadd.f32 %v456, %v385
        %v461 = vadd.f32 %v457, %v385
        %v462 = vmax.f32 %v458, 0.0
        %v463 = vmax.f32 %v459, 0.0
        %v464 = vmax.f32 %v460, 0.0
        %v465 = vmax.f32 %v461, 0.0
        %v466 = vmax.f32 %v391, %v462
        %v467 = vmax.f32 %v392, %v463
        %v468 = vmax.f32 %v393, %v464
        %v469 = vmax.f32 %v394, %v465
        %s470 = scalar_lea.vmem %s266, 64 [#allocation2]
        %v471 = vld [vmem:[%s470] sm:$0xff]
        %v472 = vld [vmem:[%s470 + $0x8] sm:$0xff]
        %v473 = vld [vmem:[%s470 + $0x10] sm:$0xff]
        %v474 = vld [vmem:[%s470 + $0x18] sm:$0xff]
        %v475 = vunpack.c.l.bf16 %v471
        %v476 = vunpack.c.h.bf16 %v471
        %v477 = vunpack.c.l.bf16 %v472
        %v478 = vunpack.c.h.bf16 %v472
        %v479 = vunpack.c.l.bf16 %v473
        %v480 = vunpack.c.h.bf16 %v473
        %v481 = vunpack.c.l.bf16 %v474
        %v482 = vunpack.c.h.bf16 %v474
        %483 = vmatpush.msra.mxu0 0.0
        %484 = vmatpush.msra.mxu0 0.0
        %485 = vmatpush.msra.mxu0 0.0
        %486 = vmatpush.msra.mxu0 0.0
        %487 = vmatpush.msra.mxu0 0.0
        %488 = vmatpush.msra.mxu0 0.0
        %489 = vmatpush.msra.mxu0 0.0
        %490 = vmatpush.msra.mxu0 0.0
        %491 = vmatpush.msra.mxu0 0.0
        %492 = vmatpush.msra.mxu0 0.0
        %493 = vmatpush.msra.mxu0 0.0
        %494 = vmatpush.msra.mxu0 0.0
        %495 = vmatpush.msra.mxu0 %v481
        %496 = vmatpush.msra.mxu0 %v479
        %497 = vmatpush.msra.mxu0 %v477
        %498 = vmatpush.msra.mxu0 %v475
        %499 = vmatmul.f32.gmra.mxu0 %v312
        %v500 = vpop.f32.mrf.mxu0
        %v501 = vadd.f32 0.0, %v500
        %502 = vmatmul.f32.gmra.mxu0 %v315
        %v503 = vpop.f32.mrf.mxu0
        %v504 = vadd.f32 0.0, %v503
        %505 = vdwg.mxu0
        %506 = vmatpush.msra.mxu0 0.0
        %507 = vmatpush.msra.mxu0 0.0
        %508 = vmatpush.msra.mxu0 0.0
        %509 = vmatpush.msra.mxu0 0.0
        %510 = vmatpush.msra.mxu0 0.0
        %511 = vmatpush.msra.mxu0 0.0
        %512 = vmatpush.msra.mxu0 0.0
        %513 = vmatpush.msra.mxu0 0.0
        %514 = vmatpush.msra.mxu0 0.0
        %515 = vmatpush.msra.mxu0 0.0
        %516 = vmatpush.msra.mxu0 0.0
        %517 = vmatpush.msra.mxu0 0.0
        %518 = vmatpush.msra.mxu0 %v482
        %519 = vmatpush.msra.mxu0 %v480
        %520 = vmatpush.msra.mxu0 %v478
        %521 = vmatpush.msra.mxu0 %v476
        %522 = vmatmul.f32.gmra.mxu0 %v312
        %v523 = vpop.f32.mrf.mxu0
        %v524 = vadd.f32 0.0, %v523
        %525 = vmatmul.f32.gmra.mxu0 %v315
        %v526 = vpop.f32.mrf.mxu0
        %v527 = vadd.f32 0.0, %v526
        %528 = vdwg.mxu0
        %v529 = vmul.f32 %v501, %v366
        %v530 = vmul.f32 %v524, %v366
        %v531 = vmul.f32 %v504, %v371
        %v532 = vmul.f32 %v527, %v371
        %v533 = vadd.f32 %v529, %v380
        %v534 = vadd.f32 %v530, %v380
        %v535 = vadd.f32 %v531, %v385
        %v536 = vadd.f32 %v532, %v385
        %v537 = vmax.f32 %v533, 0.0
        %v538 = vmax.f32 %v534, 0.0
        %v539 = vmax.f32 %v535, 0.0
        %v540 = vmax.f32 %v536, 0.0
        %v541 = vmax.f32 %v466, %v537
        %v542 = vmax.f32 %v467, %v538
        %v543 = vmax.f32 %v468, %v539
        %v544 = vmax.f32 %v469, %v540
        %s545 = scalar_lea.vmem %s266, 96 [#allocation2]
        %v546 = vld [vmem:[%s545] sm:$0xff]
        %v547 = vld [vmem:[%s545 + $0x8] sm:$0xff]
        %v548 = vld [vmem:[%s545 + $0x10] sm:$0xff]
        %v549 = vld [vmem:[%s545 + $0x18] sm:$0xff]
        %v550 = vunpack.c.l.bf16 %v546
        %v551 = vunpack.c.h.bf16 %v546
        %v552 = vunpack.c.l.bf16 %v547
        %v553 = vunpack.c.h.bf16 %v547
        %v554 = vunpack.c.l.bf16 %v548
        %v555 = vunpack.c.h.bf16 %v548
        %v556 = vunpack.c.l.bf16 %v549
        %v557 = vunpack.c.h.bf16 %v549
        %558 = vmatpush.msra.mxu0 0.0
        %559 = vmatpush.msra.mxu0 0.0
        %560 = vmatpush.msra.mxu0 0.0
        %561 = vmatpush.msra.mxu0 0.0
        %562 = vmatpush.msra.mxu0 0.0
        %563 = vmatpush.msra.mxu0 0.0
        %564 = vmatpush.msra.mxu0 0.0
        %565 = vmatpush.msra.mxu0 0.0
        %566 = vmatpush.msra.mxu0 0.0
        %567 = vmatpush.msra.mxu0 0.0
        %568 = vmatpush.msra.mxu0 0.0
        %569 = vmatpush.msra.mxu0 0.0
        %570 = vmatpush.msra.mxu0 %v556
        %571 = vmatpush.msra.mxu0 %v554
        %572 = vmatpush.msra.mxu0 %v552
        %573 = vmatpush.msra.mxu0 %v550
        %574 = vmatmul.f32.gmra.mxu0 %v312
        %v575 = vpop.f32.mrf.mxu0
        %v576 = vadd.f32 0.0, %v575
        %577 = vmatmul.f32.gmra.mxu0 %v315
        %v578 = vpop.f32.mrf.mxu0
        %v579 = vadd.f32 0.0, %v578
        %580 = vdwg.mxu0
        %581 = vmatpush.msra.mxu0 0.0
        %582 = vmatpush.msra.mxu0 0.0
        %583 = vmatpush.msra.mxu0 0.0
        %584 = vmatpush.msra.mxu0 0.0
        %585 = vmatpush.msra.mxu0 0.0
        %586 = vmatpush.msra.mxu0 0.0
        %587 = vmatpush.msra.mxu0 0.0
        %588 = vmatpush.msra.mxu0 0.0
        %589 = vmatpush.msra.mxu0 0.0
        %590 = vmatpush.msra.mxu0 0.0
        %591 = vmatpush.msra.mxu0 0.0
        %592 = vmatpush.msra.mxu0 0.0
        %593 = vmatpush.msra.mxu0 %v557
        %594 = vmatpush.msra.mxu0 %v555
        %595 = vmatpush.msra.mxu0 %v553
        %596 = vmatpush.msra.mxu0 %v551
        %597 = vmatmul.f32.gmra.mxu0 %v312
        %v598 = vpop.f32.mrf.mxu0
        %v599 = vadd.f32 0.0, %v598
        %600 = vmatmul.f32.gmra.mxu0 %v315
        %v601 = vpop.f32.mrf.mxu0
        %v602 = vadd.f32 0.0, %v601
        %603 = vdwg.mxu0
        %v604 = vmul.f32 %v576, %v366
        %v605 = vmul.f32 %v599, %v366
        %v606 = vmul.f32 %v579, %v371
        %v607 = vmul.f32 %v602, %v371
        %v608 = vadd.f32 %v604, %v380
        %v609 = vadd.f32 %v605, %v380
        %v610 = vadd.f32 %v606, %v385
        %v611 = vadd.f32 %v607, %v385
        %v612 = vmax.f32 %v608, 0.0
        %v613 = vmax.f32 %v609, 0.0
        %v614 = vmax.f32 %v610, 0.0
        %v615 = vmax.f32 %v611, 0.0
        %v616 = vmax.f32 %v541, %v612
        %v617 = vmax.f32 %v542, %v613
        %v618 = vmax.f32 %v543, %v614
        %v619 = vmax.f32 %v544, %v615
        %v620 = vpack.c.bf16 %v617, %v616
        %v621 = vpack.c.bf16 %v619, %v618
        %622 = vst [vmem:[%s287] sm:$0xff] %v620
        %623 = vst [vmem:[%s287 + $0x8] sm:$0xff] %v621
        %s624 = sand.u32 %s112, 1
        %s625 = sand.u32 %s112, 1
        %s626 = smul.addr %s625, 16
        %s627 = scalar_lea.vmem [#allocation3], %s626
        // Predicated region
        $region75: #{convnet_forward.3} parent=69 // pred_check
          %p628 = pneg %p122
        $region76: #{convnet_forward.3} parent=69 // pred_check_branch
          %630 = sbr.rel (%p628) target = $region78
        $region77: #{convnet_forward.3} parent=69 // pred_region
          %s631 = smul.u32 2, %s15
          %s632 = smul.addr %s631, 4
          %s633 = scalar_lea.vmem %s4, %s632
          // Predicated region
          $region79: #{convnet_forward.3} parent=77 // pred_check
            _
          $region80: #{convnet_forward.3} parent=77 // pred_check_branch
            %635 = sbr.rel (0) target = $region82
          $region81: #{convnet_forward.3} parent=77 // pred_region
            // Predicated region
            $region83: #{convnet_forward.3} parent=81 // pred_check
              _
            $region84: #{convnet_forward.3} parent=81 // pred_check_branch
              %637 = sbr.rel (0) target = $region86
            $region85: #{convnet_forward.3} parent=81 // pred_region
              // Predicated region
              $region98: #{convnet_forward.3} parent=85 // pred_check
                _
              $region99: #{convnet_forward.3} parent=85 // pred_check_branch
                %655 = sbr.rel (0) target = $region101
              $region100: #{convnet_forward.3} parent=85 // pred_region
                loop: start=0, step=1, limit=1
                $region102: #{convnet_forward.3} parent=100 // loop_pre_header
                  _
                $region103: #{convnet_forward.3} parent=100 // loop_header
                  %s657 = sphi 0, %s661
                  %p658 = scmp.ge.s32.totalorder %s657, 1
                  %s662 = sphi %s627, %s627
                  %s663 = sphi %s633, %s633
                $region104: #{convnet_forward.3} parent=100 // loop_header_branch
                  %660 = sbr.rel (%p658) target = $region108
                $region105: #{convnet_forward.3} parent=100 // loop_body
                  %v664 = vld [vmem:[%s662] sm:$0xff]
                  %665 = vst [vmem:[%s663] sm:$0xff] %v664
                  %v666 = vld [vmem:[%s662 + $0x8] sm:$0xff]
                  %667 = vst [vmem:[%s663 + $0x10] sm:$0xff] %v666
                $region106: #{convnet_forward.3} parent=100 // loop_footer
                  %s661 = sadd.s32 1, %s657
                $region107: #{convnet_forward.3} parent=100 // loop_footer_branch
                  %656 = sbr.rel target = $region103
                $region108: #{convnet_forward.3} parent=100 // loop_exit
                  _
              $region101: #{convnet_forward.3} parent=85 // pred_fallthru
                _
              // Predicated region
              $region109: #{convnet_forward.3} parent=85 // pred_check
                _
              $region110: #{convnet_forward.3} parent=85 // pred_check_branch
                %669 = sbr.rel target = $region112
              $region111: #{convnet_forward.3} parent=85 // pred_region
                _
              $region112: #{convnet_forward.3} parent=85 // pred_fallthru
                _
            $region86: #{convnet_forward.3} parent=81 // pred_fallthru
              _
            // Predicated region
            $region87: #{convnet_forward.3} parent=81 // pred_check
              _
            $region88: #{convnet_forward.3} parent=81 // pred_check_branch
              %639 = sbr.rel target = $region90
            $region89: #{convnet_forward.3} parent=81 // pred_region
              %s641 = ssub.s32 256, 1
              loop: start=0, step=1, limit=1
              $region91: #{convnet_forward.3} parent=89 // loop_pre_header
                _
              $region92: #{convnet_forward.3} parent=89 // loop_header
                %s643 = sphi 0, %s647
                %p644 = scmp.ge.s32.totalorder %s643, 1
                %s648 = sphi %s627, %s627
                %s649 = sphi %s633, %s633
              $region93: #{convnet_forward.3} parent=89 // loop_header_branch
                %646 = sbr.rel (%p644) target = $region97
              $region94: #{convnet_forward.3} parent=89 // loop_body
                %v650 = vld [vmem:[%s648] sm:%s641]
                %651 = vst [vmem:[%s649] sm:%s641] %v650
                %v652 = vld [vmem:[%s648 + $0x8] sm:%s641]
                %653 = vst [vmem:[%s649 + $0x10] sm:%s641] %v652
              $region95: #{convnet_forward.3} parent=89 // loop_footer
                %s647 = sadd.s32 1, %s643
              $region96: #{convnet_forward.3} parent=89 // loop_footer_branch
                %642 = sbr.rel target = $region92
              $region97: #{convnet_forward.3} parent=89 // loop_exit
                _
            $region90: #{convnet_forward.3} parent=81 // pred_fallthru
              _
          $region82: #{convnet_forward.3} parent=77 // pred_fallthru
            _
          %670 = vnop
        $region78: #{convnet_forward.3} parent=69 // pred_fallthru
          _
      $region70: #{convnet_forward.3} parent=5 // pred_fallthru
        _
      %p671 = scmp.le.s32.totalorder 2, %s10
      // Predicated region
      $region113: #{convnet_forward.3} parent=5 // pred_check
        %p672 = pneg %p671
      $region114: #{convnet_forward.3} parent=5 // pred_check_branch
        %674 = sbr.rel (%p672) target = $region116
      $region115: #{convnet_forward.3} parent=5 // pred_region
        %s675 = ssub.s32 %s10, 2
        // Predicated region
        $region117: #{convnet_forward.3} parent=115 // pred_check
          %p676 = pneg %p128
        $region118: #{convnet_forward.3} parent=115 // pred_check_branch
          %678 = sbr.rel (%p676) target = $region120
        $region119: #{convnet_forward.3} parent=115 // pred_region
          %s679 = sand.u32 %s113, 1
          %s680 = sand.u32 %s113, 1
          %s681 = smul.addr %s680, 16
          %s682 = scalar_lea.vmem [#allocation3], %s681
        $region120: #{convnet_forward.3} parent=115 // pred_fallthru
          _
      $region116: #{convnet_forward.3} parent=5 // pred_fallthru
        _
    $region6: #{convnet_forward.3} parent=1 // loop_footer
      %s14 = sadd.s32 1, %s10
    $region7: #{convnet_forward.3} parent=1 // loop_footer_branch
      %9 = sbr.rel target = $region3
    $region8: #{convnet_forward.3} parent=1 // loop_exit
      _

// kernel: convnet_forward.4
$region0: #{convnet_forward.4}
  #allocation0 [shape = 'u32[]', space=smem, size = 0x4, offset = 0x4, fixed_abs, tag = 'smem constant byte address 0x4 - core index']
  #allocation1 [shape = 'u32[72,128]{1,0:T(1,128)}', space=vmem, size = 0x9000, scoped, tag = 'internal scratch']
  %s0 = inlined_call_operand.vmem [shape: bf16[4,400,128], index: 0, kind: input, shape index: {}]
  %s1 = inlined_call_operand.vmem [shape: bf16[32,400], index: 1, kind: input, shape index: {}]
  %s2 = inlined_call_operand.vmem [shape: f32[32,1], index: 2, kind: input, shape index: {}]
  %s3 = inlined_call_operand.vmem [shape: f32[32,1], index: 3, kind: input, shape index: {}]
  %s4 = inlined_call_operand.vmem [shape: bf16[32,128], index: 4, kind: output, shape index: {}]
  %s5 = sld [smem:[#allocation0]]
  $region26: #{convnet_forward.4} parent=0
    _
  %s7 = ssub.s32 1, %s5
  %s8 = scalar_select 0, %s7, %s5
  // Predicated region
  $region2: #{convnet_forward.4} parent=0 // pred_check
    _
  $region3: #{convnet_forward.4} parent=0 // pred_check_branch
    %10 = sbr.rel (0) target = $region5
  $region4: #{convnet_forward.4} parent=0 // pred_region
    _
  $region5: #{convnet_forward.4} parent=0 // pred_fallthru
    _
  // Predicated region
  $region6: #{convnet_forward.4} parent=0 // pred_check
    _
  $region7: #{convnet_forward.4} parent=0 // pred_check_branch
    %12 = sbr.rel (0) target = $region9
  $region8: #{convnet_forward.4} parent=0 // pred_region
    _
  $region9: #{convnet_forward.4} parent=0 // pred_fallthru
    _
  // Predicated region
  $region10: #{convnet_forward.4} parent=0 // pred_check
    _
  $region11: #{convnet_forward.4} parent=0 // pred_check_branch
    %14 = sbr.rel (0) target = $region13
  $region12: #{convnet_forward.4} parent=0 // pred_region
    _
  $region13: #{convnet_forward.4} parent=0 // pred_fallthru
    _
  // Predicated region
  $region14: #{convnet_forward.4} parent=0 // pred_check
    _
  $region15: #{convnet_forward.4} parent=0 // pred_check_branch
    %16 = sbr.rel (0) target = $region17
  $region16: #{convnet_forward.4} parent=0 // pred_region
    _
  $region17: #{convnet_forward.4} parent=0 // pred_fallthru
    _
  %v17 = vld [vmem:[%s1] sm:$0xff]
  %v18 = vld [vmem:[%s1 + $0x8] sm:$0xff]
  %v19 = vld [vmem:[%s1 + $0x10] sm:$0xff]
  %v20 = vld [vmem:[%s1 + $0x18] sm:$0xff]
  %v21 = vld [vmem:[%s1 + $0x20] sm:$0xff]
  %v22 = vld [vmem:[%s1 + $0x28] sm:$0xff]
  %v23 = vld [vmem:[%s1 + $0x30] sm:$0xff]
  %v24 = vld [vmem:[%s1 + $0x38] sm:$0xff]
  %v25 = vunpack.c.l.bf16 %v17
  %v26 = vunpack.c.h.bf16 %v17
  %v27 = vunpack.c.l.bf16 %v18
  %v28 = vunpack.c.h.bf16 %v18
  %v29 = vunpack.c.l.bf16 %v19
  %v30 = vunpack.c.h.bf16 %v19
  %v31 = vunpack.c.l.bf16 %v20
  %v32 = vunpack.c.h.bf16 %v20
  %v33 = vunpack.c.l.bf16 %v21
  %v34 = vunpack.c.h.bf16 %v21
  %v35 = vunpack.c.l.bf16 %v22
  %v36 = vunpack.c.h.bf16 %v22
  %v37 = vunpack.c.l.bf16 %v23
  %v38 = vunpack.c.h.bf16 %v23
  %v39 = vunpack.c.l.bf16 %v24
  %v40 = vunpack.c.h.bf16 %v24
  %v41 = vld [vmem:[%s2] sm:$0xff]
  %v42 = vld [vmem:[%s2 + $0x8] sm:$0xff]
  %v43 = vld [vmem:[%s2 + $0x10] sm:$0xff]
  %v44 = vld [vmem:[%s2 + $0x18] sm:$0xff]
  %v45 = vld [vmem:[%s3] sm:$0xff]
  %v46 = vld [vmem:[%s3 + $0x8] sm:$0xff]
  %v47 = vld [vmem:[%s3 + $0x10] sm:$0xff]
  %v48 = vld [vmem:[%s3 + $0x18] sm:$0xff]
  %v49 = vld [vmem:[%s0] sm:$0xf]
  %v50 = vld [vmem:[%s0 + $0x4] sm:$0xf]
  %v51 = vld [vmem:[%s0 + $0x8] sm:$0xf]
  %v52 = vld [vmem:[%s0 + $0xc] sm:$0xf]
  %v53 = vld [vmem:[%s0 + $0x10] sm:$0xf]
  %v54 = vld [vmem:[%s0 + $0x14] sm:$0xf]
  %v55 = vld [vmem:[%s0 + $0x18] sm:$0xf]
  %v56 = vld [vmem:[%s0 + $0x1c] sm:$0xf]
  %v57 = vld [vmem:[%s0 + $0x20] sm:$0xf]
  %v58 = vld [vmem:[%s0 + $0x24] sm:$0xf]
  %v59 = vld [vmem:[%s0 + $0x28] sm:$0xf]
  %v60 = vld [vmem:[%s0 + $0x2c] sm:$0xf]
  %v61 = vld [vmem:[%s0 + $0x30] sm:$0xf]
  %v62 = vld [vmem:[%s0 + $0x34] sm:$0xf]
  %v63 = vld [vmem:[%s0 + $0x38] sm:$0xf]
  %v64 = vld [vmem:[%s0 + $0x3c] sm:$0xf]
  %v65 = vld [vmem:[%s0 + $0x40] sm:$0xf]
  %v66 = vld [vmem:[%s0 + $0x44] sm:$0xf]
  %v67 = vld [vmem:[%s0 + $0x48] sm:$0xf]
  %v68 = vld [vmem:[%s0 + $0x4c] sm:$0xf]
  %v69 = vld [vmem:[%s0 + $0x50] sm:$0xf]
  %v70 = vld [vmem:[%s0 + $0x54] sm:$0xf]
  %v71 = vld [vmem:[%s0 + $0x58] sm:$0xf]
  %v72 = vld [vmem:[%s0 + $0x5c] sm:$0xf]
  %v73 = vld [vmem:[%s0 + $0x60] sm:$0xf]
  %v74 = vld [vmem:[%s0 + $0x64] sm:$0xf]
  %v75 = vld [vmem:[%s0 + $0x68] sm:$0xf]
  %v76 = vld [vmem:[%s0 + $0x6c] sm:$0xf]
  %v77 = vld [vmem:[%s0 + $0x70] sm:$0xf]
  %v78 = vld [vmem:[%s0 + $0x74] sm:$0xf]
  %v79 = vld [vmem:[%s0 + $0x78] sm:$0xf]
  %v80 = vld [vmem:[%s0 + $0x7c] sm:$0xf]
  %v81 = vld [vmem:[%s0 + $0x80] sm:$0xf]
  %v82 = vld [vmem:[%s0 + $0x84] sm:$0xf]
  %v83 = vld [vmem:[%s0 + $0x88] sm:$0xf]
  %v84 = vld [vmem:[%s0 + $0x8c] sm:$0xf]
  %v85 = vld [vmem:[%s0 + $0x90] sm:$0xf]
  %v86 = vld [vmem:[%s0 + $0x94] sm:$0xf]
  %v87 = vld [vmem:[%s0 + $0x98] sm:$0xf]
  %v88 = vld [vmem:[%s0 + $0x9c] sm:$0xf]
  %v89 = vld [vmem:[%s0 + $0xa0] sm:$0xf]
  %v90 = vld [vmem:[%s0 + $0xa4] sm:$0xf]
  %v91 = vld [vmem:[%s0 + $0xa8] sm:$0xf]
  %v92 = vld [vmem:[%s0 + $0xac] sm:$0xf]
  %v93 = vld [vmem:[%s0 + $0xb0] sm:$0xf]
  %v94 = vld [vmem:[%s0 + $0xb4] sm:$0xf]
  %v95 = vld [vmem:[%s0 + $0xb8] sm:$0xf]
  %v96 = vld [vmem:[%s0 + $0xbc] sm:$0xf]
  %v97 = vld [vmem:[%s0 + $0xc0] sm:$0xf]
  %v98 = vld [vmem:[%s0 + $0xc4] sm:$0xf]
  %v99 = vunpack.c.l.bf16 %v49
  %v100 = vunpack.c.l.bf16 %v50
  %v101 = vunpack.c.l.bf16 %v51
  %v102 = vunpack.c.l.bf16 %v52
  %v103 = vunpack.c.l.bf16 %v53
  %v104 = vunpack.c.l.bf16 %v54
  %v105 = vunpack.c.l.bf16 %v55
  %v106 = vunpack.c.l.bf16 %v56
  %v107 = vunpack.c.l.bf16 %v57
  %v108 = vunpack.c.l.bf16 %v58
  %v109 = vunpack.c.l.bf16 %v59
  %v110 = vunpack.c.l.bf16 %v60
  %v111 = vunpack.c.l.bf16 %v61
  %v112 = vunpack.c.l.bf16 %v62
  %v113 = vunpack.c.l.bf16 %v63
  %v114 = vunpack.c.l.bf16 %v64
  %v115 = vunpack.c.l.bf16 %v65
  %v116 = vunpack.c.l.bf16 %v66
  %v117 = vunpack.c.l.bf16 %v67
  %v118 = vunpack.c.l.bf16 %v68
  %v119 = vunpack.c.l.bf16 %v69
  %v120 = vunpack.c.l.bf16 %v70
  %v121 = vunpack.c.l.bf16 %v71
  %v122 = vunpack.c.l.bf16 %v72
  %v123 = vunpack.c.l.bf16 %v73
  %v124 = vunpack.c.l.bf16 %v74
  %v125 = vunpack.c.l.bf16 %v75
  %v126 = vunpack.c.l.bf16 %v76
  %v127 = vunpack.c.l.bf16 %v77
  %v128 = vunpack.c.l.bf16 %v78
  %v129 = vunpack.c.l.bf16 %v79
  %v130 = vunpack.c.l.bf16 %v80
  %v131 = vunpack.c.l.bf16 %v81
  %v132 = vunpack.c.l.bf16 %v82
  %v133 = vunpack.c.l.bf16 %v83
  %v134 = vunpack.c.l.bf16 %v84
  %v135 = vunpack.c.l.bf16 %v85
  %v136 = vunpack.c.l.bf16 %v86
  %v137 = vunpack.c.l.bf16 %v87
  %v138 = vunpack.c.l.bf16 %v88
  %v139 = vunpack.c.l.bf16 %v89
  %v140 = vunpack.c.l.bf16 %v90
  %v141 = vunpack.c.l.bf16 %v91
  %v142 = vunpack.c.l.bf16 %v92
  %v143 = vunpack.c.l.bf16 %v93
  %v144 = vunpack.c.l.bf16 %v94
  %v145 = vunpack.c.l.bf16 %v95
  %v146 = vunpack.c.l.bf16 %v96
  %v147 = vunpack.c.l.bf16 %v97
  %v148 = vunpack.c.l.bf16 %v98
  %vm149 = vcmask 130048
  %v151 = vsel %vm149, %v28, 0
  %v154 = vsel %vm149, %v32, 0
  %v157 = vsel %vm149, %v36, 0
  %v160 = vsel %vm149, %v40, 0
  %162 = vmatpush.msra.mxu0 %v114
  %163 = vmatpush.msra.mxu0 %v113
  %164 = vmatpush.msra.mxu0 %v112
  %165 = vmatpush.msra.mxu0 %v111
  %166 = vmatpush.msra.mxu0 %v110
  %167 = vmatpush.msra.mxu0 %v109
  %168 = vmatpush.msra.mxu0 %v108
  %169 = vmatpush.msra.mxu0 %v107
  %170 = vmatpush.msra.mxu0 %v106
  %171 = vmatpush.msra.mxu0 %v105
  %172 = vmatpush.msra.mxu0 %v104
  %173 = vmatpush.msra.mxu0 %v103
  %174 = vmatpush.msra.mxu0 %v102
  %175 = vmatpush.msra.mxu0 %v101
  %176 = vmatpush.msra.mxu0 %v100
  %177 = vmatpush.msra.mxu0 %v99
  %178 = vmatmul.f32.gmra.mxu0 %v25
  %v179 = vpop.f32.mrf.mxu0
  %v180 = vadd.f32 0.0, %v179
  %181 = vmatmul.f32.gmra.mxu0 %v29
  %v182 = vpop.f32.mrf.mxu0
  %v183 = vadd.f32 0.0, %v182
  %184 = vmatmul.f32.gmra.mxu0 %v33
  %v185 = vpop.f32.mrf.mxu0
  %v186 = vadd.f32 0.0, %v185
  %187 = vmatmul.f32.gmra.mxu0 %v37
  %v188 = vpop.f32.mrf.mxu0
  %v189 = vadd.f32 0.0, %v188
  %190 = vdwg.mxu0
  %191 = vmatpush.msra.mxu0 %v130
  %192 = vmatpush.msra.mxu0 %v129
  %193 = vmatpush.msra.mxu0 %v128
  %194 = vmatpush.msra.mxu0 %v127
  %195 = vmatpush.msra.mxu0 %v126
  %196 = vmatpush.msra.mxu0 %v125
  %197 = vmatpush.msra.mxu0 %v124
  %198 = vmatpush.msra.mxu0 %v123
  %199 = vmatpush.msra.mxu0 %v122
  %200 = vmatpush.msra.mxu0 %v121
  %201 = vmatpush.msra.mxu0 %v120
  %202 = vmatpush.msra.mxu0 %v119
  %203 = vmatpush.msra.mxu0 %v118
  %204 = vmatpush.msra.mxu0 %v117
  %205 = vmatpush.msra.mxu0 %v116
  %206 = vmatpush.msra.mxu0 %v115
  %207 = vmatmul.f32.gmra.mxu0 %v26
  %v208 = vpop.f32.mrf.mxu0
  %v209 = vadd.f32 %v180, %v208
  %210 = vmatmul.f32.gmra.mxu0 %v30
  %v211 = vpop.f32.mrf.mxu0
  %v212 = vadd.f32 %v183, %v211
  %213 = vmatmul.f32.gmra.mxu0 %v34
  %v214 = vpop.f32.mrf.mxu0
  %v215 = vadd.f32 %v186, %v214
  %216 = vmatmul.f32.gmra.mxu0 %v38
  %v217 = vpop.f32.mrf.mxu0
  %v218 = vadd.f32 %v189, %v217
  %219 = vdwg.mxu0
  %220 = vmatpush.msra.mxu0 %v146
  %221 = vmatpush.msra.mxu0 %v145
  %222 = vmatpush.msra.mxu0 %v144
  %223 = vmatpush.msra.mxu0 %v143
  %224 = vmatpush.msra.mxu0 %v142
  %225 = vmatpush.msra.mxu0 %v141
  %226 = vmatpush.msra.mxu0 %v140
  %227 = vmatpush.msra.mxu0 %v139
  %228 = vmatpush.msra.mxu0 %v138
  %229 = vmatpush.msra.mxu0 %v137
  %230 = vmatpush.msra.mxu0 %v136
  %231 = vmatpush.msra.mxu0 %v135
  %232 = vmatpush.msra.mxu0 %v134
  %233 = vmatpush.msra.mxu0 %v133
  %234 = vmatpush.msra.mxu0 %v132
  %235 = vmatpush.msra.mxu0 %v131
  %236 = vmatmul.f32.gmra.mxu0 %v27
  %v237 = vpop.f32.mrf.mxu0
  %v238 = vadd.f32 %v209, %v237
  %239 = vmatmul.f32.gmra.mxu0 %v31
  %v240 = vpop.f32.mrf.mxu0
  %v241 = vadd.f32 %v212, %v240
  %242 = vmatmul.f32.gmra.mxu0 %v35
  %v243 = vpop.f32.mrf.mxu0
  %v244 = vadd.f32 %v215, %v243
  %245 = vmatmul.f32.gmra.mxu0 %v39
  %v246 = vpop.f32.mrf.mxu0
  %v247 = vadd.f32 %v218, %v246
  %248 = vdwg.mxu0
  %249 = vmatpush.msra.mxu0 0.0
  %250 = vmatpush.msra.mxu0 0.0
  %251 = vmatpush.msra.mxu0 0.0
  %252 = vmatpush.msra.mxu0 0.0
  %253 = vmatpush.msra.mxu0 0.0
  %254 = vmatpush.msra.mxu0 0.0
  %255 = vmatpush.msra.mxu0 0.0
  %256 = vmatpush.msra.mxu0 0.0
  %257 = vmatpush.msra.mxu0 0.0
  %258 = vmatpush.msra.mxu0 0.0
  %259 = vmatpush.msra.mxu0 0.0
  %260 = vmatpush.msra.mxu0 0.0
  %261 = vmatpush.msra.mxu0 0.0
  %262 = vmatpush.msra.mxu0 0.0
  %263 = vmatpush.msra.mxu0 %v148
  %264 = vmatpush.msra.mxu0 %v147
  %265 = vmatmul.f32.gmra.mxu0 %v151
  %v266 = vpop.f32.mrf.mxu0
  %v267 = vadd.f32 %v238, %v266
  %268 = vmatmul.f32.gmra.mxu0 %v154
  %v269 = vpop.f32.mrf.mxu0
  %v270 = vadd.f32 %v241, %v269
  %271 = vmatmul.f32.gmra.mxu0 %v157
  %v272 = vpop.f32.mrf.mxu0
  %v273 = vadd.f32 %v244, %v272
  %274 = vmatmul.f32.gmra.mxu0 %v160
  %v275 = vpop.f32.mrf.mxu0
  %v276 = vadd.f32 %v247, %v275
  %277 = vdwg.mxu0
  %279 = vset.pattern.permute.xlu0 0
  %280 = vperm.xlu0 %279, %v41
  %v281 = vpop.permute.xlu0 %280
  %284 = vset.pattern.permute.xlu0 0
  %285 = vperm.xlu0 %284, %v42
  %v286 = vpop.permute.xlu0 %285
  %289 = vset.pattern.permute.xlu0 0
  %290 = vperm.xlu0 %289, %v43
  %v291 = vpop.permute.xlu0 %290
  %294 = vset.pattern.permute.xlu0 0
  %295 = vperm.xlu0 %294, %v44
  %v296 = vpop.permute.xlu0 %295
  %v298 = vmul.f32 %v267, %v281
  %v299 = vmul.f32 %v270, %v286
  %v300 = vmul.f32 %v273, %v291
  %v301 = vmul.f32 %v276, %v296
  %303 = vset.pattern.permute.xlu0 0
  %304 = vperm.xlu0 %303, %v45
  %v305 = vpop.permute.xlu0 %304
  %308 = vset.pattern.permute.xlu0 0
  %309 = vperm.xlu0 %308, %v46
  %v310 = vpop.permute.xlu0 %309
  %313 = vset.pattern.permute.xlu0 0
  %314 = vperm.xlu0 %313, %v47
  %v315 = vpop.permute.xlu0 %314
  %318 = vset.pattern.permute.xlu0 0
  %319 = vperm.xlu0 %318, %v48
  %v320 = vpop.permute.xlu0 %319
  %v322 = vadd.f32 %v298, %v305
  %v323 = vadd.f32 %v299, %v310
  %v324 = vadd.f32 %v300, %v315
  %v325 = vadd.f32 %v301, %v320
  %v326 = vmax.f32 %v322, 0.0
  %v327 = vmax.f32 %v323, 0.0
  %v328 = vmax.f32 %v324, 0.0
  %v329 = vmax.f32 %v325, 0.0
  %s330 = scalar_lea.vmem %s0, 200
  %v331 = vld [vmem:[%s330] sm:$0xf]
  %v332 = vld [vmem:[%s330 + $0x4] sm:$0xf]
  %v333 = vld [vmem:[%s330 + $0x8] sm:$0xf]
  %v334 = vld [vmem:[%s330 + $0xc] sm:$0xf]
  %v335 = vld [vmem:[%s330 + $0x10] sm:$0xf]
  %v336 = vld [vmem:[%s330 + $0x14] sm:$0xf]
  %v337 = vld [vmem:[%s330 + $0x18] sm:$0xf]
  %v338 = vld [vmem:[%s330 + $0x1c] sm:$0xf]
  %v339 = vld [vmem:[%s330 + $0x20] sm:$0xf]
  %v340 = vld [vmem:[%s330 + $0x24] sm:$0xf]
  %v341 = vld [vmem:[%s330 + $0x28] sm:$0xf]
  %v342 = vld [vmem:[%s330 + $0x2c] sm:$0xf]
  %v343 = vld [vmem:[%s330 + $0x30] sm:$0xf]
  %v344 = vld [vmem:[%s330 + $0x34] sm:$0xf]
  %v345 = vld [vmem:[%s330 + $0x38] sm:$0xf]
  %v346 = vld [vmem:[%s330 + $0x3c] sm:$0xf]
  %v347 = vld [vmem:[%s330 + $0x40] sm:$0xf]
  %v348 = vld [vmem:[%s330 + $0x44] sm:$0xf]
  %v349 = vld [vmem:[%s330 + $0x48] sm:$0xf]
  %v350 = vld [vmem:[%s330 + $0x4c] sm:$0xf]
  %v351 = vld [vmem:[%s330 + $0x50] sm:$0xf]
  %v352 = vld [vmem:[%s330 + $0x54] sm:$0xf]
  %v353 = vld [vmem:[%s330 + $0x58] sm:$0xf]
  %v354 = vld [vmem:[%s330 + $0x5c] sm:$0xf]
  %v355 = vld [vmem:[%s330 + $0x60] sm:$0xf]
  %v356 = vld [vmem:[%s330 + $0x64] sm:$0xf]
  %v357 = vld [vmem:[%s330 + $0x68] sm:$0xf]
  %v358 = vld [vmem:[%s330 + $0x6c] sm:$0xf]
  %v359 = vld [vmem:[%s330 + $0x70] sm:$0xf]
  %v360 = vld [vmem:[%s330 + $0x74] sm:$0xf]
  %v361 = vld [vmem:[%s330 + $0x78] sm:$0xf]
  %v362 = vld [vmem:[%s330 + $0x7c] sm:$0xf]
  %v363 = vld [vmem:[%s330 + $0x80] sm:$0xf]
  %v364 = vld [vmem:[%s330 + $0x84] sm:$0xf]
  %v365 = vld [vmem:[%s330 + $0x88] sm:$0xf]
  %v366 = vld [vmem:[%s330 + $0x8c] sm:$0xf]
  %v367 = vld [vmem:[%s330 + $0x90] sm:$0xf]
  %v368 = vld [vmem:[%s330 + $0x94] sm:$0xf]
  %v369 = vld [vmem:[%s330 + $0x98] sm:$0xf]
  %v370 = vld [vmem:[%s330 + $0x9c] sm:$0xf]
  %v371 = vld [vmem:[%s330 + $0xa0] sm:$0xf]
  %v372 = vld [vmem:[%s330 + $0xa4] sm:$0xf]
  %v373 = vld [vmem:[%s330 + $0xa8] sm:$0xf]
  %v374 = vld [vmem:[%s330 + $0xac] sm:$0xf]
  %v375 = vld [vmem:[%s330 + $0xb0] sm:$0xf]
  %v376 = vld [vmem:[%s330 + $0xb4] sm:$0xf]
  %v377 = vld [vmem:[%s330 + $0xb8] sm:$0xf]
  %v378 = vld [vmem:[%s330 + $0xbc] sm:$0xf]
  %v379 = vld [vmem:[%s330 + $0xc0] sm:$0xf]
  %v380 = vld [vmem:[%s330 + $0xc4] sm:$0xf]
  %v381 = vunpack.c.l.bf16 %v331
  %v382 = vunpack.c.l.bf16 %v332
  %v383 = vunpack.c.l.bf16 %v333
  %v384 = vunpack.c.l.bf16 %v334
  %v385 = vunpack.c.l.bf16 %v335
  %v386 = vunpack.c.l.bf16 %v336
  %v387 = vunpack.c.l.bf16 %v337
  %v388 = vunpack.c.l.bf16 %v338
  %v389 = vunpack.c.l.bf16 %v339
  %v390 = vunpack.c.l.bf16 %v340
  %v391 = vunpack.c.l.bf16 %v341
  %v392 = vunpack.c.l.bf16 %v342
  %v393 = vunpack.c.l.bf16 %v343
  %v394 = vunpack.c.l.bf16 %v344
  %v395 = vunpack.c.l.bf16 %v345
  %v396 = vunpack.c.l.bf16 %v346
  %v397 = vunpack.c.l.bf16 %v347
  %v398 = vunpack.c.l.bf16 %v348
  %v399 = vunpack.c.l.bf16 %v349
  %v400 = vunpack.c.l.bf16 %v350
  %v401 = vunpack.c.l.bf16 %v351
  %v402 = vunpack.c.l.bf16 %v352
  %v403 = vunpack.c.l.bf16 %v353
  %v404 = vunpack.c.l.bf16 %v354
  %v405 = vunpack.c.l.bf16 %v355
  %v406 = vunpack.c.l.bf16 %v356
  %v407 = vunpack.c.l.bf16 %v357
  %v408 = vunpack.c.l.bf16 %v358
  %v409 = vunpack.c.l.bf16 %v359
  %v410 = vunpack.c.l.bf16 %v360
  %v411 = vunpack.c.l.bf16 %v361
  %v412 = vunpack.c.l.bf16 %v362
  %v413 = vunpack.c.l.bf16 %v363
  %v414 = vunpack.c.l.bf16 %v364
  %v415 = vunpack.c.l.bf16 %v365
  %v416 = vunpack.c.l.bf16 %v366
  %v417 = vunpack.c.l.bf16 %v367
  %v418 = vunpack.c.l.bf16 %v368
  %v419 = vunpack.c.l.bf16 %v369
  %v420 = vunpack.c.l.bf16 %v370
  %v421 = vunpack.c.l.bf16 %v371
  %v422 = vunpack.c.l.bf16 %v372
  %v423 = vunpack.c.l.bf16 %v373
  %v424 = vunpack.c.l.bf16 %v374
  %v425 = vunpack.c.l.bf16 %v375
  %v426 = vunpack.c.l.bf16 %v376
  %v427 = vunpack.c.l.bf16 %v377
  %v428 = vunpack.c.l.bf16 %v378
  %v429 = vunpack.c.l.bf16 %v379
  %v430 = vunpack.c.l.bf16 %v380
  %431 = vmatpush.msra.mxu0 %v396
  %432 = vmatpush.msra.mxu0 %v395
  %433 = vmatpush.msra.mxu0 %v394
  %434 = vmatpush.msra.mxu0 %v393
  %435 = vmatpush.msra.mxu0 %v392
  %436 = vmatpush.msra.mxu0 %v391
  %437 = vmatpush.msra.mxu0 %v390
  %438 = vmatpush.msra.mxu0 %v389
  %439 = vmatpush.msra.mxu0 %v388
  %440 = vmatpush.msra.mxu0 %v387
  %441 = vmatpush.msra.mxu0 %v386
  %442 = vmatpush.msra.mxu0 %v385
  %443 = vmatpush.msra.mxu0 %v384
  %444 = vmatpush.msra.mxu0 %v383
  %445 = vmatpush.msra.mxu0 %v382
  %446 = vmatpush.msra.mxu0 %v381
  %447 = vmatmul.f32.gmra.mxu0 %v25
  %v448 = vpop.f32.mrf.mxu0
  %v449 = vadd.f32 0.0, %v448
  %450 = vmatmul.f32.gmra.mxu0 %v29
  %v451 = vpop.f32.mrf.mxu0
  %v452 = vadd.f32 0.0, %v451
  %453 = vmatmul.f32.gmra.mxu0 %v33
  %v454 = vpop.f32.mrf.mxu0
  %v455 = vadd.f32 0.0, %v454
  %456 = vmatmul.f32.gmra.mxu0 %v37
  %v457 = vpop.f32.mrf.mxu0
  %v458 = vadd.f32 0.0, %v457
  %459 = vdwg.mxu0
  %460 = vmatpush.msra.mxu0 %v412
  %461 = vmatpush.msra.mxu0 %v411
  %462 = vmatpush.msra.mxu0 %v410
  %463 = vmatpush.msra.mxu0 %v409
  %464 = vmatpush.msra.mxu0 %v408
  %465 = vmatpush.msra.mxu0 %v407
  %466 = vmatpush.msra.mxu0 %v406
  %467 = vmatpush.msra.mxu0 %v405
  %468 = vmatpush.msra.mxu0 %v404
  %469 = vmatpush.msra.mxu0 %v403
  %470 = vmatpush.msra.mxu0 %v402
  %471 = vmatpush.msra.mxu0 %v401
  %472 = vmatpush.msra.mxu0 %v400
  %473 = vmatpush.msra.mxu0 %v399
  %474 = vmatpush.msra.mxu0 %v398
  %475 = vmatpush.msra.mxu0 %v397
  %476 = vmatmul.f32.gmra.mxu0 %v26
  %v477 = vpop.f32.mrf.mxu0
  %v478 = vadd.f32 %v449, %v477
  %479 = vmatmul.f32.gmra.mxu0 %v30
  %v480 = vpop.f32.mrf.mxu0
  %v481 = vadd.f32 %v452, %v480
  %482 = vmatmul.f32.gmra.mxu0 %v34
  %v483 = vpop.f32.mrf.mxu0
  %v484 = vadd.f32 %v455, %v483
  %485 = vmatmul.f32.gmra.mxu0 %v38
  %v486 = vpop.f32.mrf.mxu0
  %v487 = vadd.f32 %v458, %v486
  %488 = vdwg.mxu0
  %489 = vmatpush.msra.mxu0 %v428
  %490 = vmatpush.msra.mxu0 %v427
  %491 = vmatpush.msra.mxu0 %v426
  %492 = vmatpush.msra.mxu0 %v425
  %493 = vmatpush.msra.mxu0 %v424
  %494 = vmatpush.msra.mxu0 %v423
  %495 = vmatpush.msra.mxu0 %v422
  %496 = vmatpush.msra.mxu0 %v421
  %497 = vmatpush.msra.mxu0 %v420
  %498 = vmatpush.msra.mxu0 %v419
  %499 = vmatpush.msra.mxu0 %v418
  %500 = vmatpush.msra.mxu0 %v417
  %501 = vmatpush.msra.mxu0 %v416
  %502 = vmatpush.msra.mxu0 %v415
  %503 = vmatpush.msra.mxu0 %v414
  %504 = vmatpush.msra.mxu0 %v413
  %505 = vmatmul.f32.gmra.mxu0 %v27
  %v506 = vpop.f32.mrf.mxu0
  %v507 = vadd.f32 %v478, %v506
  %508 = vmatmul.f32.gmra.mxu0 %v31
  %v509 = vpop.f32.mrf.mxu0
  %v510 = vadd.f32 %v481, %v509
  %511 = vmatmul.f32.gmra.mxu0 %v35
  %v512 = vpop.f32.mrf.mxu0
  %v513 = vadd.f32 %v484, %v512
  %514 = vmatmul.f32.gmra.mxu0 %v39
  %v515 = vpop.f32.mrf.mxu0
  %v516 = vadd.f32 %v487, %v515
  %517 = vdwg.mxu0
  %518 = vmatpush.msra.mxu0 0.0
  %519 = vmatpush.msra.mxu0 0.0
  %520 = vmatpush.msra.mxu0 0.0
  %521 = vmatpush.msra.mxu0 0.0
  %522 = vmatpush.msra.mxu0 0.0
  %523 = vmatpush.msra.mxu0 0.0
  %524 = vmatpush.msra.mxu0 0.0
  %525 = vmatpush.msra.mxu0 0.0
  %526 = vmatpush.msra.mxu0 0.0
  %527 = vmatpush.msra.mxu0 0.0
  %528 = vmatpush.msra.mxu0 0.0
  %529 = vmatpush.msra.mxu0 0.0
  %530 = vmatpush.msra.mxu0 0.0
  %531 = vmatpush.msra.mxu0 0.0
  %532 = vmatpush.msra.mxu0 %v430
  %533 = vmatpush.msra.mxu0 %v429
  %534 = vmatmul.f32.gmra.mxu0 %v151
  %v535 = vpop.f32.mrf.mxu0
  %v536 = vadd.f32 %v507, %v535
  %537 = vmatmul.f32.gmra.mxu0 %v154
  %v538 = vpop.f32.mrf.mxu0
  %v539 = vadd.f32 %v510, %v538
  %540 = vmatmul.f32.gmra.mxu0 %v157
  %v541 = vpop.f32.mrf.mxu0
  %v542 = vadd.f32 %v513, %v541
  %543 = vmatmul.f32.gmra.mxu0 %v160
  %v544 = vpop.f32.mrf.mxu0
  %v545 = vadd.f32 %v516, %v544
  %546 = vdwg.mxu0
  %v547 = vmul.f32 %v536, %v281
  %v548 = vmul.f32 %v539, %v286
  %v549 = vmul.f32 %v542, %v291
  %v550 = vmul.f32 %v545, %v296
  %v551 = vadd.f32 %v547, %v305
  %v552 = vadd.f32 %v548, %v310
  %v553 = vadd.f32 %v549, %v315
  %v554 = vadd.f32 %v550, %v320
  %v555 = vmax.f32 %v551, 0.0
  %v556 = vmax.f32 %v552, 0.0
  %v557 = vmax.f32 %v553, 0.0
  %v558 = vmax.f32 %v554, 0.0
  %v559 = vmax.f32 %v326, %v555
  %v560 = vmax.f32 %v327, %v556
  %v561 = vmax.f32 %v328, %v557
  %v562 = vmax.f32 %v329, %v558
  %s563 = scalar_lea.vmem %s0, 400
  %v564 = vld [vmem:[%s563] sm:$0xf]
  %v565 = vld [vmem:[%s563 + $0x4] sm:$0xf]
  %v566 = vld [vmem:[%s563 + $0x8] sm:$0xf]
  %v567 = vld [vmem:[%s563 + $0xc] sm:$0xf]
  %v568 = vld [vmem:[%s563 + $0x10] sm:$0xf]
  %v569 = vld [vmem:[%s563 + $0x14] sm:$0xf]
  %v570 = vld [vmem:[%s563 + $0x18] sm:$0xf]
  %v571 = vld [vmem:[%s563 + $0x1c] sm:$0xf]
  %v572 = vld [vmem:[%s563 + $0x20] sm:$0xf]
  %v573 = vld [vmem:[%s563 + $0x24] sm:$0xf]
  %v574 = vld [vmem:[%s563 + $0x28] sm:$0xf]
  %v575 = vld [vmem:[%s563 + $0x2c] sm:$0xf]
  %v576 = vld [vmem:[%s563 + $0x30] sm:$0xf]
  %v577 = vld [vmem:[%s563 + $0x34] sm:$0xf]
  %v578 = vld [vmem:[%s563 + $0x38] sm:$0xf]
  %v579 = vld [vmem:[%s563 + $0x3c] sm:$0xf]
  %v580 = vld [vmem:[%s563 + $0x40] sm:$0xf]
  %v581 = vld [vmem:[%s563 + $0x44] sm:$0xf]
  %v582 = vld [vmem:[%s563 + $0x48] sm:$0xf]
  %v583 = vld [vmem:[%s563 + $0x4c] sm:$0xf]
  %v584 = vld [vmem:[%s563 + $0x50] sm:$0xf]
  %v585 = vld [vmem:[%s563 + $0x54] sm:$0xf]
  %v586 = vld [vmem:[%s563 + $0x58] sm:$0xf]
  %v587 = vld [vmem:[%s563 + $0x5c] sm:$0xf]
  %v588 = vld [vmem:[%s563 + $0x60] sm:$0xf]
  %v589 = vld [vmem:[%s563 + $0x64] sm:$0xf]
  %v590 = vld [vmem:[%s563 + $0x68] sm:$0xf]
  %v591 = vld [vmem:[%s563 + $0x6c] sm:$0xf]
  %v592 = vld [vmem:[%s563 + $0x70] sm:$0xf]
  %v593 = vld [vmem:[%s563 + $0x74] sm:$0xf]
  %v594 = vld [vmem:[%s563 + $0x78] sm:$0xf]
  %v595 = vld [vmem:[%s563 + $0x7c] sm:$0xf]
  %v596 = vld [vmem:[%s563 + $0x80] sm:$0xf]
  %v597 = vld [vmem:[%s563 + $0x84] sm:$0xf]
  %v598 = vld [vmem:[%s563 + $0x88] sm:$0xf]
  %v599 = vld [vmem:[%s563 + $0x8c] sm:$0xf]
  %v600 = vld [vmem:[%s563 + $0x90] sm:$0xf]
  %v601 = vld [vmem:[%s563 + $0x94] sm:$0xf]
  %v602 = vld [vmem:[%s563 + $0x98] sm:$0xf]
  %v603 = vld [vmem:[%s563 + $0x9c] sm:$0xf]
  %v604 = vld [vmem:[%s563 + $0xa0] sm:$0xf]
  %v605 = vld [vmem:[%s563 + $0xa4] sm:$0xf]
  %v606 = vld [vmem:[%s563 + $0xa8] sm:$0xf]
  %v607 = vld [vmem:[%s563 + $0xac] sm:$0xf]
  %v608 = vld [vmem:[%s563 + $0xb0] sm:$0xf]
  %v609 = vld [vmem:[%s563 + $0xb4] sm:$0xf]
  %v610 = vld [vmem:[%s563 + $0xb8] sm:$0xf]
  %v611 = vld [vmem:[%s563 + $0xbc] sm:$0xf]
  %v612 = vld [vmem:[%s563 + $0xc0] sm:$0xf]
  %v613 = vld [vmem:[%s563 + $0xc4] sm:$0xf]
  %v614 = vunpack.c.l.bf16 %v564
  %v615 = vunpack.c.l.bf16 %v565
  %v616 = vunpack.c.l.bf16 %v566
  %v617 = vunpack.c.l.bf16 %v567
  %v618 = vunpack.c.l.bf16 %v568
  %v619 = vunpack.c.l.bf16 %v569
  %v620 = vunpack.c.l.bf16 %v570
  %v621 = vunpack.c.l.bf16 %v571
  %v622 = vunpack.c.l.bf16 %v572
  %v623 = vunpack.c.l.bf16 %v573
  %v624 = vunpack.c.l.bf16 %v574
  %v625 = vunpack.c.l.bf16 %v575
  %v626 = vunpack.c.l.bf16 %v576
  %v627 = vunpack.c.l.bf16 %v577
  %v628 = vunpack.c.l.bf16 %v578
  %v629 = vunpack.c.l.bf16 %v579
  %v630 = vunpack.c.l.bf16 %v580
  %v631 = vunpack.c.l.bf16 %v581
  %v632 = vunpack.c.l.bf16 %v582
  %v633 = vunpack.c.l.bf16 %v583
  %v634 = vunpack.c.l.bf16 %v584
  %v635 = vunpack.c.l.bf16 %v585
  %v636 = vunpack.c.l.bf16 %v586
  %v637 = vunpack.c.l.bf16 %v587
  %v638 = vunpack.c.l.bf16 %v588
  %v639 = vunpack.c.l.bf16 %v589
  %v640 = vunpack.c.l.bf16 %v590
  %v641 = vunpack.c.l.bf16 %v591
  %v642 = vunpack.c.l.bf16 %v592
  %v643 = vunpack.c.l.bf16 %v593
  %v644 = vunpack.c.l.bf16 %v594
  %v645 = vunpack.c.l.bf16 %v595
  %v646 = vunpack.c.l.bf16 %v596
  %v647 = vunpack.c.l.bf16 %v597
  %v648 = vunpack.c.l.bf16 %v598
  %v649 = vunpack.c.l.bf16 %v599
  %v650 = vunpack.c.l.bf16 %v600
  %v651 = vunpack.c.l.bf16 %v601
  %v652 = vunpack.c.l.bf16 %v602
  %v653 = vunpack.c.l.bf16 %v603
  %v654 = vunpack.c.l.bf16 %v604
  %v655 = vunpack.c.l.bf16 %v605
  %v656 = vunpack.c.l.bf16 %v606
  %v657 = vunpack.c.l.bf16 %v607
  %v658 = vunpack.c.l.bf16 %v608
  %v659 = vunpack.c.l.bf16 %v609
  %v660 = vunpack.c.l.bf16 %v610
  %v661 = vunpack.c.l.bf16 %v611
  %v662 = vunpack.c.l.bf16 %v612
  %v663 = vunpack.c.l.bf16 %v613
  %664 = vmatpush.msra.mxu0 %v629
  %665 = vmatpush.msra.mxu0 %v628
  %666 = vmatpush.msra.mxu0 %v627
  %667 = vmatpush.msra.mxu0 %v626
  %668 = vmatpush.msra.mxu0 %v625
  %669 = vmatpush.msra.mxu0 %v624
  %670 = vmatpush.msra.mxu0 %v623
  %671 = vmatpush.msra.mxu0 %v622
  %672 = vmatpush.msra.mxu0 %v621
  %673 = vmatpush.msra.mxu0 %v620
  %674 = vmatpush.msra.mxu0 %v619
  %675 = vmatpush.msra.mxu0 %v618
  %676 = vmatpush.msra.mxu0 %v617
  %677 = vmatpush.msra.mxu0 %v616
  %678 = vmatpush.msra.mxu0 %v615
  %679 = vmatpush.msra.mxu0 %v614
  %680 = vmatmul.f32.gmra.mxu0 %v25
  %v681 = vpop.f32.mrf.mxu0
  %v682 = vadd.f32 0.0, %v681
  %683 = vmatmul.f32.gmra.mxu0 %v29
  %v684 = vpop.f32.mrf.mxu0
  %v685 = vadd.f32 0.0, %v684
  %686 = vmatmul.f32.gmra.mxu0 %v33
  %v687 = vpop.f32.mrf.mxu0
  %v688 = vadd.f32 0.0, %v687
  %689 = vmatmul.f32.gmra.mxu0 %v37
  %v690 = vpop.f32.mrf.mxu0
  %v691 = vadd.f32 0.0, %v690
  %692 = vdwg.mxu0
  %693 = vmatpush.msra.mxu0 %v645
  %694 = vmatpush.msra.mxu0 %v644
  %695 = vmatpush.msra.mxu0 %v643
  %696 = vmatpush.msra.mxu0 %v642
  %697 = vmatpush.msra.mxu0 %v641
  %698 = vmatpush.msra.mxu0 %v640
  %699 = vmatpush.msra.mxu0 %v639
  %700 = vmatpush.msra.mxu0 %v638
  %701 = vmatpush.msra.mxu0 %v637
  %702 = vmatpush.msra.mxu0 %v636
  %703 = vmatpush.msra.mxu0 %v635
  %704 = vmatpush.msra.mxu0 %v634
  %705 = vmatpush.msra.mxu0 %v633
  %706 = vmatpush.msra.mxu0 %v632
  %707 = vmatpush.msra.mxu0 %v631
  %708 = vmatpush.msra.mxu0 %v630
  %709 = vmatmul.f32.gmra.mxu0 %v26
  %v710 = vpop.f32.mrf.mxu0
  %v711 = vadd.f32 %v682, %v710
  %712 = vmatmul.f32.gmra.mxu0 %v30
  %v713 = vpop.f32.mrf.mxu0
  %v714 = vadd.f32 %v685, %v713
  %715 = vmatmul.f32.gmra.mxu0 %v34
  %v716 = vpop.f32.mrf.mxu0
  %v717 = vadd.f32 %v688, %v716
  %718 = vmatmul.f32.gmra.mxu0 %v38
  %v719 = vpop.f32.mrf.mxu0
  %v720 = vadd.f32 %v691, %v719
  %721 = vdwg.mxu0
  %722 = vmatpush.msra.mxu0 %v661
  %723 = vmatpush.msra.mxu0 %v660
  %724 = vmatpush.msra.mxu0 %v659
  %725 = vmatpush.msra.mxu0 %v658
  %726 = vmatpush.msra.mxu0 %v657
  %727 = vmatpush.msra.mxu0 %v656
  %728 = vmatpush.msra.mxu0 %v655
  %729 = vmatpush.msra.mxu0 %v654
  %730 = vmatpush.msra.mxu0 %v653
  %731 = vmatpush.msra.mxu0 %v652
  %732 = vmatpush.msra.mxu0 %v651
  %733 = vmatpush.msra.mxu0 %v650
  %734 = vmatpush.msra.mxu0 %v649
  %735 = vmatpush.msra.mxu0 %v648
  %736 = vmatpush.msra.mxu0 %v647
  %737 = vmatpush.msra.mxu0 %v646
  %738 = vmatmul.f32.gmra.mxu0 %v27
  %v739 = vpop.f32.mrf.mxu0
  %v740 = vadd.f32 %v711, %v739
  %741 = vmatmul.f32.gmra.mxu0 %v31
  %v742 = vpop.f32.mrf.mxu0
  %v743 = vadd.f32 %v714, %v742
  %744 = vmatmul.f32.gmra.mxu0 %v35
  %v745 = vpop.f32.mrf.mxu0
  %v746 = vadd.f32 %v717, %v745
  %747 = vmatmul.f32.gmra.mxu0 %v39
  %v748 = vpop.f32.mrf.mxu0
  %v749 = vadd.f32 %v720, %v748
  %750 = vdwg.mxu0
  %751 = vmatpush.msra.mxu0 0.0
  %752 = vmatpush.msra.mxu0 0.0
  %753 = vmatpush.msra.mxu0 0.0
  %754 = vmatpush.msra.mxu0 0.0
  %755 = vmatpush.msra.mxu0 0.0
  %756 = vmatpush.msra.mxu0 0.0
  %757 = vmatpush.msra.mxu0 0.0
  %758 = vmatpush.msra.mxu0 0.0
  %759 = vmatpush.msra.mxu0 0.0
  %760 = vmatpush.msra.mxu0 0.0
  %761 = vmatpush.msra.mxu0 0.0
  %762 = vmatpush.msra.mxu0 0.0
  %763 = vmatpush.msra.mxu0 0.0
  %764 = vmatpush.msra.mxu0 0.0
  %765 = vmatpush.msra.mxu0 %v663
  %766 = vmatpush.msra.mxu0 %v662
  %767 = vmatmul.f32.gmra.mxu0 %v151
  %v768 = vpop.f32.mrf.mxu0
  %v769 = vadd.f32 %v740, %v768
  %770 = vmatmul.f32.gmra.mxu0 %v154
  %v771 = vpop.f32.mrf.mxu0
  %v772 = vadd.f32 %v743, %v771
  %773 = vmatmul.f32.gmra.mxu0 %v157
  %v774 = vpop.f32.mrf.mxu0
  %v775 = vadd.f32 %v746, %v774
  %776 = vmatmul.f32.gmra.mxu0 %v160
  %v777 = vpop.f32.mrf.mxu0
  %v778 = vadd.f32 %v749, %v777
  %779 = vdwg.mxu0
  %v780 = vmul.f32 %v769, %v281
  %v781 = vmul.f32 %v772, %v286
  %v782 = vmul.f32 %v775, %v291
  %v783 = vmul.f32 %v778, %v296
  %v784 = vadd.f32 %v780, %v305
  %v785 = vadd.f32 %v781, %v310
  %v786 = vadd.f32 %v782, %v315
  %v787 = vadd.f32 %v783, %v320
  %v788 = vmax.f32 %v784, 0.0
  %v789 = vmax.f32 %v785, 0.0
  %v790 = vmax.f32 %v786, 0.0
  %v791 = vmax.f32 %v787, 0.0
  %v792 = vmax.f32 %v559, %v788
  %v793 = vmax.f32 %v560, %v789
  %v794 = vmax.f32 %v561, %v790
  %v795 = vmax.f32 %v562, %v791
  %s796 = scalar_lea.vmem %s0, 600
  %v797 = vld [vmem:[%s796] sm:$0xf]
  %v798 = vld [vmem:[%s796 + $0x4] sm:$0xf]
  %v799 = vld [vmem:[%s796 + $0x8] sm:$0xf]
  %v800 = vld [vmem:[%s796 + $0xc] sm:$0xf]
  %v801 = vld [vmem:[%s796 + $0x10] sm:$0xf]
  %v802 = vld [vmem:[%s796 + $0x14] sm:$0xf]
  %v803 = vld [vmem:[%s796 + $0x18] sm:$0xf]
  %v804 = vld [vmem:[%s796 + $0x1c] sm:$0xf]
  %v805 = vld [vmem:[%s796 + $0x20] sm:$0xf]
  %v806 = vld [vmem:[%s796 + $0x24] sm:$0xf]
  %v807 = vld [vmem:[%s796 + $0x28] sm:$0xf]
  %v808 = vld [vmem:[%s796 + $0x2c] sm:$0xf]
  %v809 = vld [vmem:[%s796 + $0x30] sm:$0xf]
  %v810 = vld [vmem:[%s796 + $0x34] sm:$0xf]
  %v811 = vld [vmem:[%s796 + $0x38] sm:$0xf]
  %v812 = vld [vmem:[%s796 + $0x3c] sm:$0xf]
  %v813 = vld [vmem:[%s796 + $0x40] sm:$0xf]
  %v814 = vld [vmem:[%s796 + $0x44] sm:$0xf]
  %v815 = vld [vmem:[%s796 + $0x48] sm:$0xf]
  %v816 = vld [vmem:[%s796 + $0x4c] sm:$0xf]
  %v817 = vld [vmem:[%s796 + $0x50] sm:$0xf]
  %v818 = vld [vmem:[%s796 + $0x54] sm:$0xf]
  %v819 = vld [vmem:[%s796 + $0x58] sm:$0xf]
  %v820 = vld [vmem:[%s796 + $0x5c] sm:$0xf]
  %v821 = vld [vmem:[%s796 + $0x60] sm:$0xf]
  %v822 = vld [vmem:[%s796 + $0x64] sm:$0xf]
  %v823 = vld [vmem:[%s796 + $0x68] sm:$0xf]
  %v824 = vld [vmem:[%s796 + $0x6c] sm:$0xf]
  %v825 = vld [vmem:[%s796 + $0x70] sm:$0xf]
  %v826 = vld [vmem:[%s796 + $0x74] sm:$0xf]
  %v827 = vld [vmem:[%s796 + $0x78] sm:$0xf]
  %v828 = vld [vmem:[%s796 + $0x7c] sm:$0xf]
  %v829 = vld [vmem:[%s796 + $0x80] sm:$0xf]
  %v830 = vld [vmem:[%s796 + $0x84] sm:$0xf]
  %v831 = vld [vmem:[%s796 + $0x88] sm:$0xf]
  %v832 = vld [vmem:[%s796 + $0x8c] sm:$0xf]
  %v833 = vld [vmem:[%s796 + $0x90] sm:$0xf]
  %v834 = vld [vmem:[%s796 + $0x94] sm:$0xf]
  %v835 = vld [vmem:[%s796 + $0x98] sm:$0xf]
  %v836 = vld [vmem:[%s796 + $0x9c] sm:$0xf]
  %v837 = vld [vmem:[%s796 + $0xa0] sm:$0xf]
  %v838 = vld [vmem:[%s796 + $0xa4] sm:$0xf]
  %v839 = vld [vmem:[%s796 + $0xa8] sm:$0xf]
  %v840 = vld [vmem:[%s796 + $0xac] sm:$0xf]
  %v841 = vld [vmem:[%s796 + $0xb0] sm:$0xf]
  %v842 = vld [vmem:[%s796 + $0xb4] sm:$0xf]
  %v843 = vld [vmem:[%s796 + $0xb8] sm:$0xf]
  %v844 = vld [vmem:[%s796 + $0xbc] sm:$0xf]
  %v845 = vld [vmem:[%s796 + $0xc0] sm:$0xf]
  %v846 = vld [vmem:[%s796 + $0xc4] sm:$0xf]
  %v847 = vunpack.c.l.bf16 %v797
  %v848 = vunpack.c.l.bf16 %v798
  %v849 = vunpack.c.l.bf16 %v799
  %v850 = vunpack.c.l.bf16 %v800
  %v851 = vunpack.c.l.bf16 %v801
  %v852 = vunpack.c.l.bf16 %v802
  %v853 = vunpack.c.l.bf16 %v803
  %v854 = vunpack.c.l.bf16 %v804
  %v855 = vunpack.c.l.bf16 %v805
  %v856 = vunpack.c.l.bf16 %v806
  %v857 = vunpack.c.l.bf16 %v807
  %v858 = vunpack.c.l.bf16 %v808
  %v859 = vunpack.c.l.bf16 %v809
  %v860 = vunpack.c.l.bf16 %v810
  %v861 = vunpack.c.l.bf16 %v811
  %v862 = vunpack.c.l.bf16 %v812
  %v863 = vunpack.c.l.bf16 %v813
  %v864 = vunpack.c.l.bf16 %v814
  %v865 = vunpack.c.l.bf16 %v815
  %v866 = vunpack.c.l.bf16 %v816
  %v867 = vunpack.c.l.bf16 %v817
  %v868 = vunpack.c.l.bf16 %v818
  %v869 = vunpack.c.l.bf16 %v819
  %v870 = vunpack.c.l.bf16 %v820
  %v871 = vunpack.c.l.bf16 %v821
  %v872 = vunpack.c.l.bf16 %v822
  %v873 = vunpack.c.l.bf16 %v823
  %v874 = vunpack.c.l.bf16 %v824
  %v875 = vunpack.c.l.bf16 %v825
  %v876 = vunpack.c.l.bf16 %v826
  %v877 = vunpack.c.l.bf16 %v827
  %v878 = vunpack.c.l.bf16 %v828
  %v879 = vunpack.c.l.bf16 %v829
  %v880 = vunpack.c.l.bf16 %v830
  %v881 = vunpack.c.l.bf16 %v831
  %v882 = vunpack.c.l.bf16 %v832
  %v883 = vunpack.c.l.bf16 %v833
  %v884 = vunpack.c.l.bf16 %v834
  %v885 = vunpack.c.l.bf16 %v835
  %v886 = vunpack.c.l.bf16 %v836
  %v887 = vunpack.c.l.bf16 %v837
  %v888 = vunpack.c.l.bf16 %v838
  %v889 = vunpack.c.l.bf16 %v839
  %v890 = vunpack.c.l.bf16 %v840
  %v891 = vunpack.c.l.bf16 %v841
  %v892 = vunpack.c.l.bf16 %v842
  %v893 = vunpack.c.l.bf16 %v843
  %v894 = vunpack.c.l.bf16 %v844
  %v895 = vunpack.c.l.bf16 %v845
  %v896 = vunpack.c.l.bf16 %v846
  %897 = vmatpush.msra.mxu0 %v862
  %898 = vmatpush.msra.mxu0 %v861
  %899 = vmatpush.msra.mxu0 %v860
  %900 = vmatpush.msra.mxu0 %v859
  %901 = vmatpush.msra.mxu0 %v858
  %902 = vmatpush.msra.mxu0 %v857
  %903 = vmatpush.msra.mxu0 %v856
  %904 = vmatpush.msra.mxu0 %v855
  %905 = vmatpush.msra.mxu0 %v854
  %906 = vmatpush.msra.mxu0 %v853
  %907 = vmatpush.msra.mxu0 %v852
  %908 = vmatpush.msra.mxu0 %v851
  %909 = vmatpush.msra.mxu0 %v850
  %910 = vmatpush.msra.mxu0 %v849
  %911 = vmatpush.msra.mxu0 %v848
  %912 = vmatpush.msra.mxu0 %v847
  %913 = vmatmul.f32.gmra.mxu0 %v25
  %v914 = vpop.f32.mrf.mxu0
  %v915 = vadd.f32 0.0, %v914
  %916 = vmatmul.f32.gmra.mxu0 %v29
  %v917 = vpop.f32.mrf.mxu0
  %v918 = vadd.f32 0.0, %v917
  %919 = vmatmul.f32.gmra.mxu0 %v33
  %v920 = vpop.f32.mrf.mxu0
  %v921 = vadd.f32 0.0, %v920
  %922 = vmatmul.f32.gmra.mxu0 %v37
  %v923 = vpop.f32.mrf.mxu0
  %v924 = vadd.f32 0.0, %v923
  %925 = vdwg.mxu0
  %926 = vmatpush.msra.mxu0 %v878
  %927 = vmatpush.msra.mxu0 %v877
  %928 = vmatpush.msra.mxu0 %v876
  %929 = vmatpush.msra.mxu0 %v875
  %930 = vmatpush.msra.mxu0 %v874
  %931 = vmatpush.msra.mxu0 %v873
  %932 = vmatpush.msra.mxu0 %v872
  %933 = vmatpush.msra.mxu0 %v871
  %934 = vmatpush.msra.mxu0 %v870
  %935 = vmatpush.msra.mxu0 %v869
  %936 = vmatpush.msra.mxu0 %v868
  %937 = vmatpush.msra.mxu0 %v867
  %938 = vmatpush.msra.mxu0 %v866
  %939 = vmatpush.msra.mxu0 %v865
  %940 = vmatpush.msra.mxu0 %v864
  %941 = vmatpush.msra.mxu0 %v863
  %942 = vmatmul.f32.gmra.mxu0 %v26
  %v943 = vpop.f32.mrf.mxu0
  %v944 = vadd.f32 %v915, %v943
  %945 = vmatmul.f32.gmra.mxu0 %v30
  %v946 = vpop.f32.mrf.mxu0
  %v947 = vadd.f32 %v918, %v946
  %948 = vmatmul.f32.gmra.mxu0 %v34
  %v949 = vpop.f32.mrf.mxu0
  %v950 = vadd.f32 %v921, %v949
  %951 = vmatmul.f32.gmra.mxu0 %v38
  %v952 = vpop.f32.mrf.mxu0
  %v953 = vadd.f32 %v924, %v952
  %954 = vdwg.mxu0
  %955 = vmatpush.msra.mxu0 %v894
  %956 = vmatpush.msra.mxu0 %v893
  %957 = vmatpush.msra.mxu0 %v892
  %958 = vmatpush.msra.mxu0 %v891
  %959 = vmatpush.msra.mxu0 %v890
  %960 = vmatpush.msra.mxu0 %v889
  %961 = vmatpush.msra.mxu0 %v888
  %962 = vmatpush.msra.mxu0 %v887
  %963 = vmatpush.msra.mxu0 %v886
  %964 = vmatpush.msra.mxu0 %v885
  %965 = vmatpush.msra.mxu0 %v884
  %966 = vmatpush.msra.mxu0 %v883
  %967 = vmatpush.msra.mxu0 %v882
  %968 = vmatpush.msra.mxu0 %v881
  %969 = vmatpush.msra.mxu0 %v880
  %970 = vmatpush.msra.mxu0 %v879
  %971 = vmatmul.f32.gmra.mxu0 %v27
  %v972 = vpop.f32.mrf.mxu0
  %v973 = vadd.f32 %v944, %v972
  %974 = vmatmul.f32.gmra.mxu0 %v31
  %v975 = vpop.f32.mrf.mxu0
  %v976 = vadd.f32 %v947, %v975
  %977 = vmatmul.f32.gmra.mxu0 %v35
  %v978 = vpop.f32.mrf.mxu0
  %v979 = vadd.f32 %v950, %v978
  %980 = vmatmul.f32.gmra.mxu0 %v39
  %v981 = vpop.f32.mrf.mxu0
  %v982 = vadd.f32 %v953, %v981
  %983 = vdwg.mxu0
  %984 = vmatpush.msra.mxu0 0.0
  %985 = vmatpush.msra.mxu0 0.0
  %986 = vmatpush.msra.mxu0 0.0
  %987 = vmatpush.msra.mxu0 0.0
  %988 = vmatpush.msra.mxu0 0.0
  %989 = vmatpush.msra.mxu0 0.0
  %990 = vmatpush.msra.mxu0 0.0
  %991 = vmatpush.msra.mxu0 0.0
  %992 = vmatpush.msra.mxu0 0.0
  %993 = vmatpush.msra.mxu0 0.0
  %994 = vmatpush.msra.mxu0 0.0
  %995 = vmatpush.msra.mxu0 0.0
  %996 = vmatpush.msra.mxu0 0.0
  %997 = vmatpush.msra.mxu0 0.0
  %998 = vmatpush.msra.mxu0 %v896
  %999 = vmatpush.msra.mxu0 %v895
  %1000 = vmatmul.f32.gmra.mxu0 %v151
  %v1001 = vpop.f32.mrf.mxu0
  %v1002 = vadd.f32 %v973, %v1001
  %1003 = vmatmul.f32.gmra.mxu0 %v154
  %v1004 = vpop.f32.mrf.mxu0
  %v1005 = vadd.f32 %v976, %v1004
  %1006 = vmatmul.f32.gmra.mxu0 %v157
  %v1007 = vpop.f32.mrf.mxu0
  %v1008 = vadd.f32 %v979, %v1007
  %1009 = vmatmul.f32.gmra.mxu0 %v160
  %v1010 = vpop.f32.mrf.mxu0
  %v1011 = vadd.f32 %v982, %v1010
  %1012 = vdwg.mxu0
  %v1013 = vmul.f32 %v1002, %v281
  %v1014 = vmul.f32 %v1005, %v286
  %v1015 = vmul.f32 %v1008, %v291
  %v1016 = vmul.f32 %v1011, %v296
  %v1017 = vadd.f32 %v1013, %v305
  %v1018 = vadd.f32 %v1014, %v310
  %v1019 = vadd.f32 %v1015, %v315
  %v1020 = vadd.f32 %v1016, %v320
  %v1021 = vmax.f32 %v1017, 0.0
  %v1022 = vmax.f32 %v1018, 0.0
  %v1023 = vmax.f32 %v1019, 0.0
  %v1024 = vmax.f32 %v1020, 0.0
  %v1025 = vmax.f32 %v792, %v1021
  %v1026 = vmax.f32 %v793, %v1022
  %v1027 = vmax.f32 %v794, %v1023
  %v1028 = vmax.f32 %v795, %v1024
  %v1029 = vpack.c.bf16 %v1025, %v1025
  %v1030 = vpack.c.bf16 %v1026, %v1026
  %v1031 = vpack.c.bf16 %v1027, %v1027
  %v1032 = vpack.c.bf16 %v1028, %v1028
  %1033 = vst [vmem:[%s4] sm:$0xf] %v1029
  %1034 = vst [vmem:[%s4 + $0x4] sm:$0xf] %v1030
  %1035 = vst [vmem:[%s4 + $0x8] sm:$0xf] %v1031
  %1036 = vst [vmem:[%s4 + $0xc] sm:$0xf] %v1032
  // Predicated region
  $region18: #{convnet_forward.4} parent=0 // pred_check
    _
  $region19: #{convnet_forward.4} parent=0 // pred_check_branch
    %1038 = sbr.rel (0) target = $region21
  $region20: #{convnet_forward.4} parent=0 // pred_region
    _
  $region21: #{convnet_forward.4} parent=0 // pred_fallthru
    _
  // Predicated region
  $region22: #{convnet_forward.4} parent=0 // pred_check
    _
  $region23: #{convnet_forward.4} parent=0 // pred_check_branch
    %1040 = sbr.rel (0) target = $region25
  $region24: #{convnet_forward.4} parent=0 // pred_region
    _
  $region25: #{convnet_forward.4} parent=0 // pred_fallthru
    _

// kernel: convnet_forward.5
$region0: #{convnet_forward.5}
  #allocation0 [shape = 'u32[]', space=smem, size = 0x4, offset = 0x4, fixed_abs, tag = 'smem constant byte address 0x4 - core index']
  #allocation1 [shape = 'u32[72,128]{1,0:T(1,128)}', space=vmem, size = 0x9000, scoped, tag = 'internal scratch']
  %s0 = inlined_call_operand.vmem [shape: bf16[8,1568], index: 0, kind: input, shape index: {}]
  %s1 = inlined_call_operand.vmem [shape: bf16[1568,128], index: 1, kind: input, shape index: {}]
  %s2 = inlined_call_operand.vmem [shape: f32[1,128], index: 2, kind: input, shape index: {}]
  %s3 = inlined_call_operand.vmem [shape: f32[8,128], index: 3, kind: output, shape index: {}]
  %s4 = sld [smem:[#allocation0]]
  $region22: #{convnet_forward.5} parent=0
    _
  %s6 = ssub.s32 1, %s4
  %s7 = scalar_select 0, %s6, %s4
  // Predicated region
  $region2: #{convnet_forward.5} parent=0 // pred_check
    _
  $region3: #{convnet_forward.5} parent=0 // pred_check_branch
    %9 = sbr.rel (0) target = $region5
  $region4: #{convnet_forward.5} parent=0 // pred_region
    _
  $region5: #{convnet_forward.5} parent=0 // pred_fallthru
    _
  // Predicated region
  $region6: #{convnet_forward.5} parent=0 // pred_check
    _
  $region7: #{convnet_forward.5} parent=0 // pred_check_branch
    %11 = sbr.rel (0) target = $region9
  $region8: #{convnet_forward.5} parent=0 // pred_region
    _
  $region9: #{convnet_forward.5} parent=0 // pred_fallthru
    _
  // Predicated region
  $region10: #{convnet_forward.5} parent=0 // pred_check
    _
  $region11: #{convnet_forward.5} parent=0 // pred_check_branch
    %13 = sbr.rel (0) target = $region13
  $region12: #{convnet_forward.5} parent=0 // pred_region
    _
  $region13: #{convnet_forward.5} parent=0 // pred_fallthru
    _
  %v14 = vld [vmem:[%s0] sm:$0xff]
  %v15 = vld [vmem:[%s0 + $0x8] sm:$0xff]
  %v16 = vld [vmem:[%s0 + $0x10] sm:$0xff]
  %v17 = vld [vmem:[%s0 + $0x18] sm:$0xff]
  %v18 = vld [vmem:[%s0 + $0x20] sm:$0xff]
  %v19 = vld [vmem:[%s0 + $0x28] sm:$0xff]
  %v20 = vld [vmem:[%s0 + $0x30] sm:$0xf]
  %v21 = vunpack.c.l.bf16 %v14
  %v22 = vunpack.c.h.bf16 %v14
  %v23 = vunpack.c.l.bf16 %v15
  %v24 = vunpack.c.h.bf16 %v15
  %v25 = vunpack.c.l.bf16 %v16
  %v26 = vunpack.c.h.bf16 %v16
  %v27 = vunpack.c.l.bf16 %v17
  %v28 = vunpack.c.h.bf16 %v17
  %v29 = vunpack.c.l.bf16 %v18
  %v30 = vunpack.c.h.bf16 %v18
  %v31 = vunpack.c.l.bf16 %v19
  %v32 = vunpack.c.h.bf16 %v19
  %v33 = vunpack.c.l.bf16 %v20
  %v34 = vld [vmem:[%s1] sm:$0xf]
  %v35 = vld [vmem:[%s1 + $0x4] sm:$0xf]
  %v36 = vld [vmem:[%s1 + $0x8] sm:$0xf]
  %v37 = vld [vmem:[%s1 + $0xc] sm:$0xf]
  %v38 = vld [vmem:[%s1 + $0x10] sm:$0xf]
  %v39 = vld [vmem:[%s1 + $0x14] sm:$0xf]
  %v40 = vld [vmem:[%s1 + $0x18] sm:$0xf]
  %v41 = vld [vmem:[%s1 + $0x1c] sm:$0xf]
  %v42 = vld [vmem:[%s1 + $0x20] sm:$0xf]
  %v43 = vld [vmem:[%s1 + $0x24] sm:$0xf]
  %v44 = vld [vmem:[%s1 + $0x28] sm:$0xf]
  %v45 = vld [vmem:[%s1 + $0x2c] sm:$0xf]
  %v46 = vld [vmem:[%s1 + $0x30] sm:$0xf]
  %v47 = vld [vmem:[%s1 + $0x34] sm:$0xf]
  %v48 = vld [vmem:[%s1 + $0x38] sm:$0xf]
  %v49 = vld [vmem:[%s1 + $0x3c] sm:$0xf]
  %v50 = vld [vmem:[%s1 + $0x40] sm:$0xf]
  %v51 = vld [vmem:[%s1 + $0x44] sm:$0xf]
  %v52 = vld [vmem:[%s1 + $0x48] sm:$0xf]
  %v53 = vld [vmem:[%s1 + $0x4c] sm:$0xf]
  %v54 = vld [vmem:[%s1 + $0x50] sm:$0xf]
  %v55 = vld [vmem:[%s1 + $0x54] sm:$0xf]
  %v56 = vld [vmem:[%s1 + $0x58] sm:$0xf]
  %v57 = vld [vmem:[%s1 + $0x5c] sm:$0xf]
  %v58 = vld [vmem:[%s1 + $0x60] sm:$0xf]
  %v59 = vld [vmem:[%s1 + $0x64] sm:$0xf]
  %v60 = vld [vmem:[%s1 + $0x68] sm:$0xf]
  %v61 = vld [vmem:[%s1 + $0x6c] sm:$0xf]
  %v62 = vld [vmem:[%s1 + $0x70] sm:$0xf]
  %v63 = vld [vmem:[%s1 + $0x74] sm:$0xf]
  %v64 = vld [vmem:[%s1 + $0x78] sm:$0xf]
  %v65 = vld [vmem:[%s1 + $0x7c] sm:$0xf]
  %v66 = vld [vmem:[%s1 + $0x80] sm:$0xf]
  %v67 = vld [vmem:[%s1 + $0x84] sm:$0xf]
  %v68 = vld [vmem:[%s1 + $0x88] sm:$0xf]
  %v69 = vld [vmem:[%s1 + $0x8c] sm:$0xf]
  %v70 = vld [vmem:[%s1 + $0x90] sm:$0xf]
  %v71 = vld [vmem:[%s1 + $0x94] sm:$0xf]
  %v72 = vld [vmem:[%s1 + $0x98] sm:$0xf]
  %v73 = vld [vmem:[%s1 + $0x9c] sm:$0xf]
  %v74 = vld [vmem:[%s1 + $0xa0] sm:$0xf]
  %v75 = vld [vmem:[%s1 + $0xa4] sm:$0xf]
  %v76 = vld [vmem:[%s1 + $0xa8] sm:$0xf]
  %v77 = vld [vmem:[%s1 + $0xac] sm:$0xf]
  %v78 = vld [vmem:[%s1 + $0xb0] sm:$0xf]
  %v79 = vld [vmem:[%s1 + $0xb4] sm:$0xf]
  %v80 = vld [vmem:[%s1 + $0xb8] sm:$0xf]
  %v81 = vld [vmem:[%s1 + $0xbc] sm:$0xf]
  %v82 = vld [vmem:[%s1 + $0xc0] sm:$0xf]
  %v83 = vld [vmem:[%s1 + $0xc4] sm:$0xf]
  %v84 = vld [vmem:[%s1 + $0xc8] sm:$0xf]
  %v85 = vld [vmem:[%s1 + $0xcc] sm:$0xf]
  %v86 = vld [vmem:[%s1 + $0xd0] sm:$0xf]
  %v87 = vld [vmem:[%s1 + $0xd4] sm:$0xf]
  %v88 = vld [vmem:[%s1 + $0xd8] sm:$0xf]
  %v89 = vld [vmem:[%s1 + $0xdc] sm:$0xf]
  %v90 = vld [vmem:[%s1 + $0xe0] sm:$0xf]
  %v91 = vld [vmem:[%s1 + $0xe4] sm:$0xf]
  %v92 = vld [vmem:[%s1 + $0xe8] sm:$0xf]
  %v93 = vld [vmem:[%s1 + $0xec] sm:$0xf]
  %v94 = vld [vmem:[%s1 + $0xf0] sm:$0xf]
  %v95 = vld [vmem:[%s1 + $0xf4] sm:$0xf]
  %v96 = vld [vmem:[%s1 + $0xf8] sm:$0xf]
  %v97 = vld [vmem:[%s1 + $0xfc] sm:$0xf]
  %v98 = vld [vmem:[%s1 + $0x100] sm:$0xf]
  %v99 = vld [vmem:[%s1 + $0x104] sm:$0xf]
  %v100 = vld [vmem:[%s1 + $0x108] sm:$0xf]
  %v101 = vld [vmem:[%s1 + $0x10c] sm:$0xf]
  %v102 = vld [vmem:[%s1 + $0x110] sm:$0xf]
  %v103 = vld [vmem:[%s1 + $0x114] sm:$0xf]
  %v104 = vld [vmem:[%s1 + $0x118] sm:$0xf]
  %v105 = vld [vmem:[%s1 + $0x11c] sm:$0xf]
  %v106 = vld [vmem:[%s1 + $0x120] sm:$0xf]
  %v107 = vld [vmem:[%s1 + $0x124] sm:$0xf]
  %v108 = vld [vmem:[%s1 + $0x128] sm:$0xf]
  %v109 = vld [vmem:[%s1 + $0x12c] sm:$0xf]
  %v110 = vld [vmem:[%s1 + $0x130] sm:$0xf]
  %v111 = vld [vmem:[%s1 + $0x134] sm:$0xf]
  %v112 = vld [vmem:[%s1 + $0x138] sm:$0xf]
  %v113 = vld [vmem:[%s1 + $0x13c] sm:$0xf]
  %v114 = vld [vmem:[%s1 + $0x140] sm:$0xf]
  %v115 = vld [vmem:[%s1 + $0x144] sm:$0xf]
  %v116 = vld [vmem:[%s1 + $0x148] sm:$0xf]
  %v117 = vld [vmem:[%s1 + $0x14c] sm:$0xf]
  %v118 = vld [vmem:[%s1 + $0x150] sm:$0xf]
  %v119 = vld [vmem:[%s1 + $0x154] sm:$0xf]
  %v120 = vld [vmem:[%s1 + $0x158] sm:$0xf]
  %v121 = vld [vmem:[%s1 + $0x15c] sm:$0xf]
  %v122 = vld [vmem:[%s1 + $0x160] sm:$0xf]
  %v123 = vld [vmem:[%s1 + $0x164] sm:$0xf]
  %v124 = vld [vmem:[%s1 + $0x168] sm:$0xf]
  %v125 = vld [vmem:[%s1 + $0x16c] sm:$0xf]
  %v126 = vld [vmem:[%s1 + $0x170] sm:$0xf]
  %v127 = vld [vmem:[%s1 + $0x174] sm:$0xf]
  %v128 = vld [vmem:[%s1 + $0x178] sm:$0xf]
  %v129 = vld [vmem:[%s1 + $0x17c] sm:$0xf]
  %v130 = vld [vmem:[%s1 + $0x180] sm:$0xf]
  %v131 = vld [vmem:[%s1 + $0x184] sm:$0xf]
  %v132 = vld [vmem:[%s1 + $0x188] sm:$0xf]
  %v133 = vld [vmem:[%s1 + $0x18c] sm:$0xf]
  %v134 = vld [vmem:[%s1 + $0x190] sm:$0xf]
  %v135 = vld [vmem:[%s1 + $0x194] sm:$0xf]
  %v136 = vld [vmem:[%s1 + $0x198] sm:$0xf]
  %v137 = vld [vmem:[%s1 + $0x19c] sm:$0xf]
  %v138 = vld [vmem:[%s1 + $0x1a0] sm:$0xf]
  %v139 = vld [vmem:[%s1 + $0x1a4] sm:$0xf]
  %v140 = vld [vmem:[%s1 + $0x1a8] sm:$0xf]
  %v141 = vld [vmem:[%s1 + $0x1ac] sm:$0xf]
  %v142 = vld [vmem:[%s1 + $0x1b0] sm:$0xf]
  %v143 = vld [vmem:[%s1 + $0x1b4] sm:$0xf]
  %v144 = vld [vmem:[%s1 + $0x1b8] sm:$0xf]
  %v145 = vld [vmem:[%s1 + $0x1bc] sm:$0xf]
  %v146 = vld [vmem:[%s1 + $0x1c0] sm:$0xf]
  %v147 = vld [vmem:[%s1 + $0x1c4] sm:$0xf]
  %v148 = vld [vmem:[%s1 + $0x1c8] sm:$0xf]
  %v149 = vld [vmem:[%s1 + $0x1cc] sm:$0xf]
  %v150 = vld [vmem:[%s1 + $0x1d0] sm:$0xf]
  %v151 = vld [vmem:[%s1 + $0x1d4] sm:$0xf]
  %v152 = vld [vmem:[%s1 + $0x1d8] sm:$0xf]
  %v153 = vld [vmem:[%s1 + $0x1dc] sm:$0xf]
  %v154 = vld [vmem:[%s1 + $0x1e0] sm:$0xf]
  %v155 = vld [vmem:[%s1 + $0x1e4] sm:$0xf]
  %v156 = vld [vmem:[%s1 + $0x1e8] sm:$0xf]
  %v157 = vld [vmem:[%s1 + $0x1ec] sm:$0xf]
  %v158 = vld [vmem:[%s1 + $0x1f0] sm:$0xf]
  %v159 = vld [vmem:[%s1 + $0x1f4] sm:$0xf]
  %v160 = vld [vmem:[%s1 + $0x1f8] sm:$0xf]
  %v161 = vld [vmem:[%s1 + $0x1fc] sm:$0xf]
  %v162 = vld [vmem:[%s1 + $0x200] sm:$0xf]
  %v163 = vld [vmem:[%s1 + $0x204] sm:$0xf]
  %v164 = vld [vmem:[%s1 + $0x208] sm:$0xf]
  %v165 = vld [vmem:[%s1 + $0x20c] sm:$0xf]
  %v166 = vld [vmem:[%s1 + $0x210] sm:$0xf]
  %v167 = vld [vmem:[%s1 + $0x214] sm:$0xf]
  %v168 = vld [vmem:[%s1 + $0x218] sm:$0xf]
  %v169 = vld [vmem:[%s1 + $0x21c] sm:$0xf]
  %v170 = vld [vmem:[%s1 + $0x220] sm:$0xf]
  %v171 = vld [vmem:[%s1 + $0x224] sm:$0xf]
  %v172 = vld [vmem:[%s1 + $0x228] sm:$0xf]
  %v173 = vld [vmem:[%s1 + $0x22c] sm:$0xf]
  %v174 = vld [vmem:[%s1 + $0x230] sm:$0xf]
  %v175 = vld [vmem:[%s1 + $0x234] sm:$0xf]
  %v176 = vld [vmem:[%s1 + $0x238] sm:$0xf]
  %v177 = vld [vmem:[%s1 + $0x23c] sm:$0xf]
  %v178 = vld [vmem:[%s1 + $0x240] sm:$0xf]
  %v179 = vld [vmem:[%s1 + $0x244] sm:$0xf]
  %v180 = vld [vmem:[%s1 + $0x248] sm:$0xf]
  %v181 = vld [vmem:[%s1 + $0x24c] sm:$0xf]
  %v182 = vld [vmem:[%s1 + $0x250] sm:$0xf]
  %v183 = vld [vmem:[%s1 + $0x254] sm:$0xf]
  %v184 = vld [vmem:[%s1 + $0x258] sm:$0xf]
  %v185 = vld [vmem:[%s1 + $0x25c] sm:$0xf]
  %v186 = vld [vmem:[%s1 + $0x260] sm:$0xf]
  %v187 = vld [vmem:[%s1 + $0x264] sm:$0xf]
  %v188 = vld [vmem:[%s1 + $0x268] sm:$0xf]
  %v189 = vld [vmem:[%s1 + $0x26c] sm:$0xf]
  %v190 = vld [vmem:[%s1 + $0x270] sm:$0xf]
  %v191 = vld [vmem:[%s1 + $0x274] sm:$0xf]
  %v192 = vld [vmem:[%s1 + $0x278] sm:$0xf]
  %v193 = vld [vmem:[%s1 + $0x27c] sm:$0xf]
  %v194 = vld [vmem:[%s1 + $0x280] sm:$0xf]
  %v195 = vld [vmem:[%s1 + $0x284] sm:$0xf]
  %v196 = vld [vmem:[%s1 + $0x288] sm:$0xf]
  %v197 = vld [vmem:[%s1 + $0x28c] sm:$0xf]
  %v198 = vld [vmem:[%s1 + $0x290] sm:$0xf]
  %v199 = vld [vmem:[%s1 + $0x294] sm:$0xf]
  %v200 = vld [vmem:[%s1 + $0x298] sm:$0xf]
  %v201 = vld [vmem:[%s1 + $0x29c] sm:$0xf]
  %v202 = vld [vmem:[%s1 + $0x2a0] sm:$0xf]
  %v203 = vld [vmem:[%s1 + $0x2a4] sm:$0xf]
  %v204 = vld [vmem:[%s1 + $0x2a8] sm:$0xf]
  %v205 = vld [vmem:[%s1 + $0x2ac] sm:$0xf]
  %v206 = vld [vmem:[%s1 + $0x2b0] sm:$0xf]
  %v207 = vld [vmem:[%s1 + $0x2b4] sm:$0xf]
  %v208 = vld [vmem:[%s1 + $0x2b8] sm:$0xf]
  %v209 = vld [vmem:[%s1 + $0x2bc] sm:$0xf]
  %v210 = vld [vmem:[%s1 + $0x2c0] sm:$0xf]
  %v211 = vld [vmem:[%s1 + $0x2c4] sm:$0xf]
  %v212 = vld [vmem:[%s1 + $0x2c8] sm:$0xf]
  %v213 = vld [vmem:[%s1 + $0x2cc] sm:$0xf]
  %v214 = vld [vmem:[%s1 + $0x2d0] sm:$0xf]
  %v215 = vld [vmem:[%s1 + $0x2d4] sm:$0xf]
  %v216 = vld [vmem:[%s1 + $0x2d8] sm:$0xf]
  %v217 = vld [vmem:[%s1 + $0x2dc] sm:$0xf]
  %v218 = vld [vmem:[%s1 + $0x2e0] sm:$0xf]
  %v219 = vld [vmem:[%s1 + $0x2e4] sm:$0xf]
  %v220 = vld [vmem:[%s1 + $0x2e8] sm:$0xf]
  %v221 = vld [vmem:[%s1 + $0x2ec] sm:$0xf]
  %v222 = vld [vmem:[%s1 + $0x2f0] sm:$0xf]
  %v223 = vld [vmem:[%s1 + $0x2f4] sm:$0xf]
  %v224 = vld [vmem:[%s1 + $0x2f8] sm:$0xf]
  %v225 = vld [vmem:[%s1 + $0x2fc] sm:$0xf]
  %v226 = vld [vmem:[%s1 + $0x300] sm:$0xf]
  %v227 = vld [vmem:[%s1 + $0x304] sm:$0xf]
  %v228 = vld [vmem:[%s1 + $0x308] sm:$0xf]
  %v229 = vld [vmem:[%s1 + $0x30c] sm:$0xf]
  %v230 = vunpack.c.l.bf16 %v34
  %v231 = vunpack.c.l.bf16 %v35
  %v232 = vunpack.c.l.bf16 %v36
  %v233 = vunpack.c.l.bf16 %v37
  %v234 = vunpack.c.l.bf16 %v38
  %v235 = vunpack.c.l.bf16 %v39
  %v236 = vunpack.c.l.bf16 %v40
  %v237 = vunpack.c.l.bf16 %v41
  %v238 = vunpack.c.l.bf16 %v42
  %v239 = vunpack.c.l.bf16 %v43
  %v240 = vunpack.c.l.bf16 %v44
  %v241 = vunpack.c.l.bf16 %v45
  %v242 = vunpack.c.l.bf16 %v46
  %v243 = vunpack.c.l.bf16 %v47
  %v244 = vunpack.c.l.bf16 %v48
  %v245 = vunpack.c.l.bf16 %v49
  %v246 = vunpack.c.l.bf16 %v50
  %v247 = vunpack.c.l.bf16 %v51
  %v248 = vunpack.c.l.bf16 %v52
  %v249 = vunpack.c.l.bf16 %v53
  %v250 = vunpack.c.l.bf16 %v54
  %v251 = vunpack.c.l.bf16 %v55
  %v252 = vunpack.c.l.bf16 %v56
  %v253 = vunpack.c.l.bf16 %v57
  %v254 = vunpack.c.l.bf16 %v58
  %v255 = vunpack.c.l.bf16 %v59
  %v256 = vunpack.c.l.bf16 %v60
  %v257 = vunpack.c.l.bf16 %v61
  %v258 = vunpack.c.l.bf16 %v62
  %v259 = vunpack.c.l.bf16 %v63
  %v260 = vunpack.c.l.bf16 %v64
  %v261 = vunpack.c.l.bf16 %v65
  %v262 = vunpack.c.l.bf16 %v66
  %v263 = vunpack.c.l.bf16 %v67
  %v264 = vunpack.c.l.bf16 %v68
  %v265 = vunpack.c.l.bf16 %v69
  %v266 = vunpack.c.l.bf16 %v70
  %v267 = vunpack.c.l.bf16 %v71
  %v268 = vunpack.c.l.bf16 %v72
  %v269 = vunpack.c.l.bf16 %v73
  %v270 = vunpack.c.l.bf16 %v74
  %v271 = vunpack.c.l.bf16 %v75
  %v272 = vunpack.c.l.bf16 %v76
  %v273 = vunpack.c.l.bf16 %v77
  %v274 = vunpack.c.l.bf16 %v78
  %v275 = vunpack.c.l.bf16 %v79
  %v276 = vunpack.c.l.bf16 %v80
  %v277 = vunpack.c.l.bf16 %v81
  %v278 = vunpack.c.l.bf16 %v82
  %v279 = vunpack.c.l.bf16 %v83
  %v280 = vunpack.c.l.bf16 %v84
  %v281 = vunpack.c.l.bf16 %v85
  %v282 = vunpack.c.l.bf16 %v86
  %v283 = vunpack.c.l.bf16 %v87
  %v284 = vunpack.c.l.bf16 %v88
  %v285 = vunpack.c.l.bf16 %v89
  %v286 = vunpack.c.l.bf16 %v90
  %v287 = vunpack.c.l.bf16 %v91
  %v288 = vunpack.c.l.bf16 %v92
  %v289 = vunpack.c.l.bf16 %v93
  %v290 = vunpack.c.l.bf16 %v94
  %v291 = vunpack.c.l.bf16 %v95
  %v292 = vunpack.c.l.bf16 %v96
  %v293 = vunpack.c.l.bf16 %v97
  %v294 = vunpack.c.l.bf16 %v98
  %v295 = vunpack.c.l.bf16 %v99
  %v296 = vunpack.c.l.bf16 %v100
  %v297 = vunpack.c.l.bf16 %v101
  %v298 = vunpack.c.l.bf16 %v102
  %v299 = vunpack.c.l.bf16 %v103
  %v300 = vunpack.c.l.bf16 %v104
  %v301 = vunpack.c.l.bf16 %v105
  %v302 = vunpack.c.l.bf16 %v106
  %v303 = vunpack.c.l.bf16 %v107
  %v304 = vunpack.c.l.bf16 %v108
  %v305 = vunpack.c.l.bf16 %v109
  %v306 = vunpack.c.l.bf16 %v110
  %v307 = vunpack.c.l.bf16 %v111
  %v308 = vunpack.c.l.bf16 %v112
  %v309 = vunpack.c.l.bf16 %v113
  %v310 = vunpack.c.l.bf16 %v114
  %v311 = vunpack.c.l.bf16 %v115
  %v312 = vunpack.c.l.bf16 %v116
  %v313 = vunpack.c.l.bf16 %v117
  %v314 = vunpack.c.l.bf16 %v118
  %v315 = vunpack.c.l.bf16 %v119
  %v316 = vunpack.c.l.bf16 %v120
  %v317 = vunpack.c.l.bf16 %v121
  %v318 = vunpack.c.l.bf16 %v122
  %v319 = vunpack.c.l.bf16 %v123
  %v320 = vunpack.c.l.bf16 %v124
  %v321 = vunpack.c.l.bf16 %v125
  %v322 = vunpack.c.l.bf16 %v126
  %v323 = vunpack.c.l.bf16 %v127
  %v324 = vunpack.c.l.bf16 %v128
  %v325 = vunpack.c.l.bf16 %v129
  %v326 = vunpack.c.l.bf16 %v130
  %v327 = vunpack.c.l.bf16 %v131
  %v328 = vunpack.c.l.bf16 %v132
  %v329 = vunpack.c.l.bf16 %v133
  %v330 = vunpack.c.l.bf16 %v134
  %v331 = vunpack.c.l.bf16 %v135
  %v332 = vunpack.c.l.bf16 %v136
  %v333 = vunpack.c.l.bf16 %v137
  %v334 = vunpack.c.l.bf16 %v138
  %v335 = vunpack.c.l.bf16 %v139
  %v336 = vunpack.c.l.bf16 %v140
  %v337 = vunpack.c.l.bf16 %v141
  %v338 = vunpack.c.l.bf16 %v142
  %v339 = vunpack.c.l.bf16 %v143
  %v340 = vunpack.c.l.bf16 %v144
  %v341 = vunpack.c.l.bf16 %v145
  %v342 = vunpack.c.l.bf16 %v146
  %v343 = vunpack.c.l.bf16 %v147
  %v344 = vunpack.c.l.bf16 %v148
  %v345 = vunpack.c.l.bf16 %v149
  %v346 = vunpack.c.l.bf16 %v150
  %v347 = vunpack.c.l.bf16 %v151
  %v348 = vunpack.c.l.bf16 %v152
  %v349 = vunpack.c.l.bf16 %v153
  %v350 = vunpack.c.l.bf16 %v154
  %v351 = vunpack.c.l.bf16 %v155
  %v352 = vunpack.c.l.bf16 %v156
  %v353 = vunpack.c.l.bf16 %v157
  %v354 = vunpack.c.l.bf16 %v158
  %v355 = vunpack.c.l.bf16 %v159
  %v356 = vunpack.c.l.bf16 %v160
  %v357 = vunpack.c.l.bf16 %v161
  %v358 = vunpack.c.l.bf16 %v162
  %v359 = vunpack.c.l.bf16 %v163
  %v360 = vunpack.c.l.bf16 %v164
  %v361 = vunpack.c.l.bf16 %v165
  %v362 = vunpack.c.l.bf16 %v166
  %v363 = vunpack.c.l.bf16 %v167
  %v364 = vunpack.c.l.bf16 %v168
  %v365 = vunpack.c.l.bf16 %v169
  %v366 = vunpack.c.l.bf16 %v170
  %v367 = vunpack.c.l.bf16 %v171
  %v368 = vunpack.c.l.bf16 %v172
  %v369 = vunpack.c.l.bf16 %v173
  %v370 = vunpack.c.l.bf16 %v174
  %v371 = vunpack.c.l.bf16 %v175
  %v372 = vunpack.c.l.bf16 %v176
  %v373 = vunpack.c.l.bf16 %v177
  %v374 = vunpack.c.l.bf16 %v178
  %v375 = vunpack.c.l.bf16 %v179
  %v376 = vunpack.c.l.bf16 %v180
  %v377 = vunpack.c.l.bf16 %v181
  %v378 = vunpack.c.l.bf16 %v182
  %v379 = vunpack.c.l.bf16 %v183
  %v380 = vunpack.c.l.bf16 %v184
  %v381 = vunpack.c.l.bf16 %v185
  %v382 = vunpack.c.l.bf16 %v186
  %v383 = vunpack.c.l.bf16 %v187
  %v384 = vunpack.c.l.bf16 %v188
  %v385 = vunpack.c.l.bf16 %v189
  %v386 = vunpack.c.l.bf16 %v190
  %v387 = vunpack.c.l.bf16 %v191
  %v388 = vunpack.c.l.bf16 %v192
  %v389 = vunpack.c.l.bf16 %v193
  %v390 = vunpack.c.l.bf16 %v194
  %v391 = vunpack.c.l.bf16 %v195
  %v392 = vunpack.c.l.bf16 %v196
  %v393 = vunpack.c.l.bf16 %v197
  %v394 = vunpack.c.l.bf16 %v198
  %v395 = vunpack.c.l.bf16 %v199
  %v396 = vunpack.c.l.bf16 %v200
  %v397 = vunpack.c.l.bf16 %v201
  %v398 = vunpack.c.l.bf16 %v202
  %v399 = vunpack.c.l.bf16 %v203
  %v400 = vunpack.c.l.bf16 %v204
  %v401 = vunpack.c.l.bf16 %v205
  %v402 = vunpack.c.l.bf16 %v206
  %v403 = vunpack.c.l.bf16 %v207
  %v404 = vunpack.c.l.bf16 %v208
  %v405 = vunpack.c.l.bf16 %v209
  %v406 = vunpack.c.l.bf16 %v210
  %v407 = vunpack.c.l.bf16 %v211
  %v408 = vunpack.c.l.bf16 %v212
  %v409 = vunpack.c.l.bf16 %v213
  %v410 = vunpack.c.l.bf16 %v214
  %v411 = vunpack.c.l.bf16 %v215
  %v412 = vunpack.c.l.bf16 %v216
  %v413 = vunpack.c.l.bf16 %v217
  %v414 = vunpack.c.l.bf16 %v218
  %v415 = vunpack.c.l.bf16 %v219
  %v416 = vunpack.c.l.bf16 %v220
  %v417 = vunpack.c.l.bf16 %v221
  %v418 = vunpack.c.l.bf16 %v222
  %v419 = vunpack.c.l.bf16 %v223
  %v420 = vunpack.c.l.bf16 %v224
  %v421 = vunpack.c.l.bf16 %v225
  %v422 = vunpack.c.l.bf16 %v226
  %v423 = vunpack.c.l.bf16 %v227
  %v424 = vunpack.c.l.bf16 %v228
  %v425 = vunpack.c.l.bf16 %v229
  %v426 = vld [vmem:[%s2] sm:$0x1]
  %v428 = vperm.slane %v426, 0
  %vm430 = vcmask 261120
  %v432 = vsel %vm430, %v33, 0
  %434 = vmatpush.msra.mxu0 %v245
  %435 = vmatpush.msra.mxu0 %v244
  %436 = vmatpush.msra.mxu0 %v243
  %437 = vmatpush.msra.mxu0 %v242
  %438 = vmatpush.msra.mxu0 %v241
  %439 = vmatpush.msra.mxu0 %v240
  %440 = vmatpush.msra.mxu0 %v239
  %441 = vmatpush.msra.mxu0 %v238
  %442 = vmatpush.msra.mxu0 %v237
  %443 = vmatpush.msra.mxu0 %v236
  %444 = vmatpush.msra.mxu0 %v235
  %445 = vmatpush.msra.mxu0 %v234
  %446 = vmatpush.msra.mxu0 %v233
  %447 = vmatpush.msra.mxu0 %v232
  %448 = vmatpush.msra.mxu0 %v231
  %449 = vmatpush.msra.mxu0 %v230
  %450 = vmatmul.f32.gmra.mxu0 %v21
  %v451 = vpop.f32.mrf.mxu0
  %v452 = vadd.f32 %v428, %v451
  %453 = vdwg.mxu0
  %454 = vmatpush.msra.mxu0 %v261
  %455 = vmatpush.msra.mxu0 %v260
  %456 = vmatpush.msra.mxu0 %v259
  %457 = vmatpush.msra.mxu0 %v258
  %458 = vmatpush.msra.mxu0 %v257
  %459 = vmatpush.msra.mxu0 %v256
  %460 = vmatpush.msra.mxu0 %v255
  %461 = vmatpush.msra.mxu0 %v254
  %462 = vmatpush.msra.mxu0 %v253
  %463 = vmatpush.msra.mxu0 %v252
  %464 = vmatpush.msra.mxu0 %v251
  %465 = vmatpush.msra.mxu0 %v250
  %466 = vmatpush.msra.mxu0 %v249
  %467 = vmatpush.msra.mxu0 %v248
  %468 = vmatpush.msra.mxu0 %v247
  %469 = vmatpush.msra.mxu0 %v246
  %470 = vmatmul.f32.gmra.mxu0 %v22
  %v471 = vpop.f32.mrf.mxu0
  %v472 = vadd.f32 %v452, %v471
  %473 = vdwg.mxu0
  %474 = vmatpush.msra.mxu0 %v277
  %475 = vmatpush.msra.mxu0 %v276
  %476 = vmatpush.msra.mxu0 %v275
  %477 = vmatpush.msra.mxu0 %v274
  %478 = vmatpush.msra.mxu0 %v273
  %479 = vmatpush.msra.mxu0 %v272
  %480 = vmatpush.msra.mxu0 %v271
  %481 = vmatpush.msra.mxu0 %v270
  %482 = vmatpush.msra.mxu0 %v269
  %483 = vmatpush.msra.mxu0 %v268
  %484 = vmatpush.msra.mxu0 %v267
  %485 = vmatpush.msra.mxu0 %v266
  %486 = vmatpush.msra.mxu0 %v265
  %487 = vmatpush.msra.mxu0 %v264
  %488 = vmatpush.msra.mxu0 %v263
  %489 = vmatpush.msra.mxu0 %v262
  %490 = vmatmul.f32.gmra.mxu0 %v23
  %v491 = vpop.f32.mrf.mxu0
  %v492 = vadd.f32 %v472, %v491
  %493 = vdwg.mxu0
  %494 = vmatpush.msra.mxu0 %v293
  %495 = vmatpush.msra.mxu0 %v292
  %496 = vmatpush.msra.mxu0 %v291
  %497 = vmatpush.msra.mxu0 %v290
  %498 = vmatpush.msra.mxu0 %v289
  %499 = vmatpush.msra.mxu0 %v288
  %500 = vmatpush.msra.mxu0 %v287
  %501 = vmatpush.msra.mxu0 %v286
  %502 = vmatpush.msra.mxu0 %v285
  %503 = vmatpush.msra.mxu0 %v284
  %504 = vmatpush.msra.mxu0 %v283
  %505 = vmatpush.msra.mxu0 %v282
  %506 = vmatpush.msra.mxu0 %v281
  %507 = vmatpush.msra.mxu0 %v280
  %508 = vmatpush.msra.mxu0 %v279
  %509 = vmatpush.msra.mxu0 %v278
  %510 = vmatmul.f32.gmra.mxu0 %v24
  %v511 = vpop.f32.mrf.mxu0
  %v512 = vadd.f32 %v492, %v511
  %513 = vdwg.mxu0
  %514 = vmatpush.msra.mxu0 %v309
  %515 = vmatpush.msra.mxu0 %v308
  %516 = vmatpush.msra.mxu0 %v307
  %517 = vmatpush.msra.mxu0 %v306
  %518 = vmatpush.msra.mxu0 %v305
  %519 = vmatpush.msra.mxu0 %v304
  %520 = vmatpush.msra.mxu0 %v303
  %521 = vmatpush.msra.mxu0 %v302
  %522 = vmatpush.msra.mxu0 %v301
  %523 = vmatpush.msra.mxu0 %v300
  %524 = vmatpush.msra.mxu0 %v299
  %525 = vmatpush.msra.mxu0 %v298
  %526 = vmatpush.msra.mxu0 %v297
  %527 = vmatpush.msra.mxu0 %v296
  %528 = vmatpush.msra.mxu0 %v295
  %529 = vmatpush.msra.mxu0 %v294
  %530 = vmatmul.f32.gmra.mxu0 %v25
  %v531 = vpop.f32.mrf.mxu0
  %v532 = vadd.f32 %v512, %v531
  %533 = vdwg.mxu0
  %534 = vmatpush.msra.mxu0 %v325
  %535 = vmatpush.msra.mxu0 %v324
  %536 = vmatpush.msra.mxu0 %v323
  %537 = vmatpush.msra.mxu0 %v322
  %538 = vmatpush.msra.mxu0 %v321
  %539 = vmatpush.msra.mxu0 %v320
  %540 = vmatpush.msra.mxu0 %v319
  %541 = vmatpush.msra.mxu0 %v318
  %542 = vmatpush.msra.mxu0 %v317
  %543 = vmatpush.msra.mxu0 %v316
  %544 = vmatpush.msra.mxu0 %v315
  %545 = vmatpush.msra.mxu0 %v314
  %546 = vmatpush.msra.mxu0 %v313
  %547 = vmatpush.msra.mxu0 %v312
  %548 = vmatpush.msra.mxu0 %v311
  %549 = vmatpush.msra.mxu0 %v310
  %550 = vmatmul.f32.gmra.mxu0 %v26
  %v551 = vpop.f32.mrf.mxu0
  %v552 = vadd.f32 %v532, %v551
  %553 = vdwg.mxu0
  %554 = vmatpush.msra.mxu0 %v341
  %555 = vmatpush.msra.mxu0 %v340
  %556 = vmatpush.msra.mxu0 %v339
  %557 = vmatpush.msra.mxu0 %v338
  %558 = vmatpush.msra.mxu0 %v337
  %559 = vmatpush.msra.mxu0 %v336
  %560 = vmatpush.msra.mxu0 %v335
  %561 = vmatpush.msra.mxu0 %v334
  %562 = vmatpush.msra.mxu0 %v333
  %563 = vmatpush.msra.mxu0 %v332
  %564 = vmatpush.msra.mxu0 %v331
  %565 = vmatpush.msra.mxu0 %v330
  %566 = vmatpush.msra.mxu0 %v329
  %567 = vmatpush.msra.mxu0 %v328
  %568 = vmatpush.msra.mxu0 %v327
  %569 = vmatpush.msra.mxu0 %v326
  %570 = vmatmul.f32.gmra.mxu0 %v27
  %v571 = vpop.f32.mrf.mxu0
  %v572 = vadd.f32 %v552, %v571
  %573 = vdwg.mxu0
  %574 = vmatpush.msra.mxu0 %v357
  %575 = vmatpush.msra.mxu0 %v356
  %576 = vmatpush.msra.mxu0 %v355
  %577 = vmatpush.msra.mxu0 %v354
  %578 = vmatpush.msra.mxu0 %v353
  %579 = vmatpush.msra.mxu0 %v352
  %580 = vmatpush.msra.mxu0 %v351
  %581 = vmatpush.msra.mxu0 %v350
  %582 = vmatpush.msra.mxu0 %v349
  %583 = vmatpush.msra.mxu0 %v348
  %584 = vmatpush.msra.mxu0 %v347
  %585 = vmatpush.msra.mxu0 %v346
  %586 = vmatpush.msra.mxu0 %v345
  %587 = vmatpush.msra.mxu0 %v344
  %588 = vmatpush.msra.mxu0 %v343
  %589 = vmatpush.msra.mxu0 %v342
  %590 = vmatmul.f32.gmra.mxu0 %v28
  %v591 = vpop.f32.mrf.mxu0
  %v592 = vadd.f32 %v572, %v591
  %593 = vdwg.mxu0
  %594 = vmatpush.msra.mxu0 %v373
  %595 = vmatpush.msra.mxu0 %v372
  %596 = vmatpush.msra.mxu0 %v371
  %597 = vmatpush.msra.mxu0 %v370
  %598 = vmatpush.msra.mxu0 %v369
  %599 = vmatpush.msra.mxu0 %v368
  %600 = vmatpush.msra.mxu0 %v367
  %601 = vmatpush.msra.mxu0 %v366
  %602 = vmatpush.msra.mxu0 %v365
  %603 = vmatpush.msra.mxu0 %v364
  %604 = vmatpush.msra.mxu0 %v363
  %605 = vmatpush.msra.mxu0 %v362
  %606 = vmatpush.msra.mxu0 %v361
  %607 = vmatpush.msra.mxu0 %v360
  %608 = vmatpush.msra.mxu0 %v359
  %609 = vmatpush.msra.mxu0 %v358
  %610 = vmatmul.f32.gmra.mxu0 %v29
  %v611 = vpop.f32.mrf.mxu0
  %v612 = vadd.f32 %v592, %v611
  %613 = vdwg.mxu0
  %614 = vmatpush.msra.mxu0 %v389
  %615 = vmatpush.msra.mxu0 %v388
  %616 = vmatpush.msra.mxu0 %v387
  %617 = vmatpush.msra.mxu0 %v386
  %618 = vmatpush.msra.mxu0 %v385
  %619 = vmatpush.msra.mxu0 %v384
  %620 = vmatpush.msra.mxu0 %v383
  %621 = vmatpush.msra.mxu0 %v382
  %622 = vmatpush.msra.mxu0 %v381
  %623 = vmatpush.msra.mxu0 %v380
  %624 = vmatpush.msra.mxu0 %v379
  %625 = vmatpush.msra.mxu0 %v378
  %626 = vmatpush.msra.mxu0 %v377
  %627 = vmatpush.msra.mxu0 %v376
  %628 = vmatpush.msra.mxu0 %v375
  %629 = vmatpush.msra.mxu0 %v374
  %630 = vmatmul.f32.gmra.mxu0 %v30
  %v631 = vpop.f32.mrf.mxu0
  %v632 = vadd.f32 %v612, %v631
  %633 = vdwg.mxu0
  %634 = vmatpush.msra.mxu0 %v405
  %635 = vmatpush.msra.mxu0 %v404
  %636 = vmatpush.msra.mxu0 %v403
  %637 = vmatpush.msra.mxu0 %v402
  %638 = vmatpush.msra.mxu0 %v401
  %639 = vmatpush.msra.mxu0 %v400
  %640 = vmatpush.msra.mxu0 %v399
  %641 = vmatpush.msra.mxu0 %v398
  %642 = vmatpush.msra.mxu0 %v397
  %643 = vmatpush.msra.mxu0 %v396
  %644 = vmatpush.msra.mxu0 %v395
  %645 = vmatpush.msra.mxu0 %v394
  %646 = vmatpush.msra.mxu0 %v393
  %647 = vmatpush.msra.mxu0 %v392
  %648 = vmatpush.msra.mxu0 %v391
  %649 = vmatpush.msra.mxu0 %v390
  %650 = vmatmul.f32.gmra.mxu0 %v31
  %v651 = vpop.f32.mrf.mxu0
  %v652 = vadd.f32 %v632, %v651
  %653 = vdwg.mxu0
  %654 = vmatpush.msra.mxu0 %v421
  %655 = vmatpush.msra.mxu0 %v420
  %656 = vmatpush.msra.mxu0 %v419
  %657 = vmatpush.msra.mxu0 %v418
  %658 = vmatpush.msra.mxu0 %v417
  %659 = vmatpush.msra.mxu0 %v416
  %660 = vmatpush.msra.mxu0 %v415
  %661 = vmatpush.msra.mxu0 %v414
  %662 = vmatpush.msra.mxu0 %v413
  %663 = vmatpush.msra.mxu0 %v412
  %664 = vmatpush.msra.mxu0 %v411
  %665 = vmatpush.msra.mxu0 %v410
  %666 = vmatpush.msra.mxu0 %v409
  %667 = vmatpush.msra.mxu0 %v408
  %668 = vmatpush.msra.mxu0 %v407
  %669 = vmatpush.msra.mxu0 %v406
  %670 = vmatmul.f32.gmra.mxu0 %v32
  %v671 = vpop.f32.mrf.mxu0
  %v672 = vadd.f32 %v652, %v671
  %673 = vdwg.mxu0
  %674 = vmatpush.msra.mxu0 0.0
  %675 = vmatpush.msra.mxu0 0.0
  %676 = vmatpush.msra.mxu0 0.0
  %677 = vmatpush.msra.mxu0 0.0
  %678 = vmatpush.msra.mxu0 0.0
  %679 = vmatpush.msra.mxu0 0.0
  %680 = vmatpush.msra.mxu0 0.0
  %681 = vmatpush.msra.mxu0 0.0
  %682 = vmatpush.msra.mxu0 0.0
  %683 = vmatpush.msra.mxu0 0.0
  %684 = vmatpush.msra.mxu0 0.0
  %685 = vmatpush.msra.mxu0 0.0
  %686 = vmatpush.msra.mxu0 %v425
  %687 = vmatpush.msra.mxu0 %v424
  %688 = vmatpush.msra.mxu0 %v423
  %689 = vmatpush.msra.mxu0 %v422
  %690 = vmatmul.f32.gmra.mxu0 %v432
  %v691 = vpop.f32.mrf.mxu0
  %v692 = vadd.f32 %v672, %v691
  %693 = vdwg.mxu0
  %694 = vst [vmem:[%s3] sm:$0xff] %v692
  // Predicated region
  $region14: #{convnet_forward.5} parent=0 // pred_check
    _
  $region15: #{convnet_forward.5} parent=0 // pred_check_branch
    %696 = sbr.rel (0) target = $region17
  $region16: #{convnet_forward.5} parent=0 // pred_region
    _
  $region17: #{convnet_forward.5} parent=0 // pred_fallthru
    _
  // Predicated region
  $region18: #{convnet_forward.5} parent=0 // pred_check
    _
  $region19: #{convnet_forward.5} parent=0 // pred_check_branch
    %698 = sbr.rel (0) target = $region21
  $region20: #{convnet_forward.5} parent=0 // pred_region
    _
  $region21: #{convnet_forward.5} parent=0 // pred_fallthru
    _

</llo_original>
